<compile_context>
chip_gen: v7x
topology: tpu7x:2x2x1
jax: 0.10.0
libtpu: 0.0.40
codegen_flags: <defaults>
</compile_context>

<pallas_src>
import functools

import jax
import jax.numpy as jnp
from jax.experimental import pallas as pl
from jax.experimental.pallas import tpu as pltpu


def _hardswish(y):
    # x * hardtanh(x + 3, 0, 6) / 6
    return y * jnp.clip(y + 3.0, 0.0, 6.0) * (1.0 / 6.0)


def _tb_fused_kernel(xs_ref, w1_ref, w2_ref, w3_ref, b1_ref, b2_ref, b3_ref,
                     o_ref, *, Ho, Wo, C1, C2):
    """Fused TB forward, one batch element per grid step.

    xs_ref: (1, Ho, Wo, 4*C1) bf16   space-to-depth input; channel group
                                     g = 2*(row parity) + (col parity)
    w1_ref: (C1, C2)       bf16      cv1 1x1 weight (BN folded)
    w2_ref: (4*C1, 4*C2)   bf16      cv2 1x1 weight, block-diag over parity planes
    w3_ref: (9*C2, C2)     bf16      cv3 3x3 weight, tap-major (ky,kx) im2col layout
    b*_ref: (1, C)         f32       folded BN biases
    o_ref : (1, Ho*Wo, 2*C2)         lane-dense output: [cv3 branch | cv1 branch]
    """
    xs = xs_ref[0].reshape(Ho * Wo, 4 * C1)            # bf16 (merge leading dims)

    # ---- branch 1: MaxPool2d(2,2) == max over the 4 parity planes, then cv1 ----
    pooled = jnp.maximum(
        jnp.maximum(xs[:, 0 * C1:1 * C1], xs[:, 1 * C1:2 * C1]),
        jnp.maximum(xs[:, 2 * C1:3 * C1], xs[:, 3 * C1:4 * C1]))
    br1 = jnp.dot(pooled, w1_ref[...], preferred_element_type=jnp.float32)
    br1 = _hardswish(br1 + b1_ref[0])                  # (Ho*Wo, C2) f32

    # ---- branch 2: cv2 (1x1 on all 4 parity planes at once, block-diag W) ----
    t = jnp.dot(xs, w2_ref[...], preferred_element_type=jnp.float32)
    t = _hardswish(t + b2_ref[0])                      # (Ho*Wo, 4*C2) f32
    ts = t.reshape(Ho, Wo, 4 * C2)
    t_ee = ts[..., 0 * C2:1 * C2]                      # t[2i,   2j  ]
    t_eo = ts[..., 1 * C2:2 * C2]                      # t[2i,   2j+1]
    t_oe = ts[..., 2 * C2:3 * C2]                      # t[2i+1, 2j  ]
    t_oo = ts[..., 3 * C2:4 * C2]                      # t[2i+1, 2j+1]

    # 'same' (pad=1) halo of the stride-2 conv: only top/left need zero fill.
    # Padding applies to cv2's OUTPUT, so the fill value is exactly 0.
    def up_i(v):   # v[i-1, j], zeros at i == 0   (leading-dim concat)
        return jnp.concatenate([jnp.zeros_like(v[:1]), v[:-1]], axis=0)

    def up_j(v):   # v[i, j-1], zeros at j == 0   (sublane-dim concat)
        return jnp.concatenate([jnp.zeros_like(v[:, :1]), v[:, :-1]], axis=1)

    # cv3: out(i,j) = sum_{ky,kx} t[2i+ky-1, 2j+kx-1] @ W3[ky,kx]
    # -> im2col: one MXU contraction of depth 9*C2 instead of 9 tiny dots.
    taps = [up_i(up_j(t_oo)), up_i(t_oe), up_i(t_oo),      # ky = 0
            up_j(t_eo),       t_ee,       t_eo,            # ky = 1
            up_j(t_oo),       t_oe,       t_oo]            # ky = 2
    patches = jnp.concatenate(taps, axis=-1)               # (Ho, Wo, 9*C2) f32
    patches = patches.reshape(Ho * Wo, 9 * C2).astype(jnp.bfloat16)
    br2 = jnp.dot(patches, w3_ref[...], preferred_element_type=jnp.float32)
    br2 = _hardswish(br2 + b3_ref[0])                      # (Ho*Wo, C2) f32

    # torch.cat([cv3(cv2(x)), cv1(mp(x))], dim=1) -> single lane-dense store.
    o_ref[0] = jnp.concatenate([br2, br1], axis=-1).astype(o_ref.dtype)


def tb_forward(x_nchw, kp):
    """TB.forward. x_nchw: (B, C1, H, W) f32 -> (B, 2*C2, H//2, W//2) f32."""
    B, C1, H, W = x_nchw.shape
    assert H % 2 == 0 and W % 2 == 0, "stride-2 block expects even H, W"
    Ho, Wo = H // 2, W // 2
    C2 = kp["b1"].shape[-1]

    x = jnp.transpose(x_nchw, (0, 2, 3, 1))                # NCHW -> NHWC
    # Space-to-depth (2x2 parity planes -> channels): one XLA transpose in the
    # wrapper (layout plumbing), bf16 for the MXU operands.
    xs = x.reshape(B, Ho, 2, Wo, 2, C1).transpose(0, 1, 3, 2, 4, 5)
    xs = xs.reshape(B, Ho, Wo, 4 * C1).astype(jnp.bfloat16)

    # TODO(synk): for large H*W, add an output-row tile grid axis (with a
    # 1-row halo on the cv2 intermediate) instead of whole-image blocks
    # (v7x has only 64 MiB VMEM).
    kernel = functools.partial(_tb_fused_kernel, Ho=Ho, Wo=Wo, C1=C1, C2=C2)
    out = pl.pallas_call(
        kernel,
        out_shape=jax.ShapeDtypeStruct((B, Ho * Wo, 2 * C2), x_nchw.dtype),
        grid=(B,),
        in_specs=[
            pl.BlockSpec((1, Ho, Wo, 4 * C1), lambda b: (b, 0, 0, 0)),
            pl.BlockSpec((C1, C2), lambda b: (0, 0)),
            pl.BlockSpec((4 * C1, 4 * C2), lambda b: (0, 0)),
            pl.BlockSpec((9 * C2, C2), lambda b: (0, 0)),
            pl.BlockSpec((1, C2), lambda b: (0, 0)),
            pl.BlockSpec((1, 4 * C2), lambda b: (0, 0)),
            pl.BlockSpec((1, C2), lambda b: (0, 0)),
        ],
        out_specs=pl.BlockSpec((1, Ho * Wo, 2 * C2), lambda b: (b, 0, 0)),
        compiler_params=pltpu.CompilerParams(
            dimension_semantics=("parallel",),
            vmem_limit_bytes=32 * 1024 * 1024,
        ),
    )(xs, kp["w1"], kp["w2"], kp["w3"], kp["b1"], kp["b2"], kp["b3"])

    out = out.reshape(B, Ho, Wo, 2 * C2)                   # metadata-only
    return jnp.transpose(out, (0, 3, 1, 2))                # NHWC -> NCHW


# ---------------- parameters (deterministic, BN folded offline) ----------------

def _fold_conv_bn(key, cin, cout, k):
    """Conv2d(k, bias=False) weight + eval-mode BatchNorm2d, folded to (w, b)."""
    kw, kg, kb, km, kv = jax.random.split(key, 5)
    w = jax.random.normal(kw, (k, k, cin, cout), jnp.float32) / jnp.sqrt(
        float(k * k * cin))
    gamma = 1.0 + 0.1 * jax.random.normal(kg, (cout,), jnp.float32)
    beta = 0.1 * jax.random.normal(kb, (cout,), jnp.float32)
    mean = 0.1 * jax.random.normal(km, (cout,), jnp.float32)
    var = 1.0 + jnp.abs(jax.random.normal(kv, (cout,), jnp.float32))
    scale = gamma * jax.lax.rsqrt(var + 1e-5)
    return {"w": w * scale, "b": beta - mean * scale}


def init_tb(key, c1, c2):
    k1, k2, k3 = jax.random.split(key, 3)
    return {"cv1": _fold_conv_bn(k1, c1, c2, 1),
            "cv2": _fold_conv_bn(k2, c1, c2, 1),
            "cv3": _fold_conv_bn(k3, c2, c2, 3)}


def pack_tb(params):
    """Kernel-layout params: bf16 weights (block-diag / im2col), f32 biases."""
    c1, c2 = params["cv1"]["w"].shape[2], params["cv1"]["w"].shape[3]
    w1 = params["cv1"]["w"].reshape(c1, c2)
    w2 = params["cv2"]["w"].reshape(c1, c2)
    w2blk = jnp.zeros((4 * c1, 4 * c2), jnp.float32)
    for g in range(4):                                   # one 1x1 conv per parity plane
        w2blk = w2blk.at[g * c1:(g + 1) * c1, g * c2:(g + 1) * c2].set(w2)
    w3 = params["cv3"]["w"].reshape(9 * c2, c2)          # tap-major (ky, kx) rows
    return {
        "w1": w1.astype(jnp.bfloat16),
        "w2": w2blk.astype(jnp.bfloat16),
        "w3": w3.astype(jnp.bfloat16),
        "b1": params["cv1"]["b"].reshape(1, c2),
        "b2": jnp.tile(params["cv2"]["b"], 4).reshape(1, 4 * c2),
        "b3": params["cv3"]["b"].reshape(1, c2),
    }


# ---------------- pure-JAX f32 reference (mirrors the PyTorch module) ----------------

def tb_reference(x_nchw, params):
    x = jnp.transpose(x_nchw, (0, 2, 3, 1)).astype(jnp.float32)
    c1 = x.shape[-1]
    # branch 2: cv2 (1x1) -> cv3 (3x3, stride 2, pad 1)
    t = _hardswish(jnp.einsum("bhwc,cd->bhwd", x,
                              params["cv2"]["w"].reshape(c1, -1)) + params["cv2"]["b"])
    y2 = jax.lax.conv_general_dilated(
        t, params["cv3"]["w"], window_strides=(2, 2), padding=((1, 1), (1, 1)),
        dimension_numbers=("NHWC", "HWIO", "NHWC"))
    y2 = _hardswish(y2 + params["cv3"]["b"])
    # branch 1: MaxPool2d(2,2) -> cv1 (1x1)
    xp = jax.lax.reduce_window(x, -jnp.inf, jax.lax.max,
                               (1, 2, 2, 1), (1, 2, 2, 1), "VALID")
    y1 = _hardswish(jnp.einsum("bhwc,cd->bhwd", xp,
                               params["cv1"]["w"].reshape(c1, -1)) + params["cv1"]["b"])
    y = jnp.concatenate([y2, y1], axis=-1)
    return jnp.transpose(y, (0, 3, 1, 2))


if __name__ == "__main__":
    key = jax.random.PRNGKey(0)
    kx, kp = jax.random.split(key)
    B, C1, C2, H, W = 2, 32, 64, 16, 16
    x = jax.random.normal(kx, (B, C1, H, W), jnp.float32)

    params = init_tb(kp, C1, C2)
    kparams = pack_tb(params)

    out = jax.jit(tb_forward)(x, kparams)
    out = jax.block_until_ready(out)
    assert out.shape == (B, 2 * C2, H // 2, W // 2), out.shape
    assert bool(jnp.all(jnp.isfinite(out)))

    ref = tb_reference(x, params)
    err = float(jnp.max(jnp.abs(out - ref)))
    tol = 5e-2 * float(jnp.max(jnp.abs(ref))) + 5e-2     # bf16 operands vs f32 ref
    assert err < tol, (err, tol)
    print("KERNEL_OK")
</pallas_src>

<mosaic_0001>
module attributes {stable_mosaic.version = 11 : i64} {
  func.func @_tb_fused_kernel(%arg0: i32, %arg1: memref<1x8x8x128xbf16, #tpu.memory_space<vmem>>, %arg2: memref<32x64xbf16, #tpu.memory_space<vmem>>, %arg3: memref<128x256xbf16, #tpu.memory_space<vmem>>, %arg4: memref<576x64xbf16, #tpu.memory_space<vmem>>, %arg5: memref<1x64xf32, #tpu.memory_space<vmem>>, %arg6: memref<1x256xf32, #tpu.memory_space<vmem>>, %arg7: memref<1x64xf32, #tpu.memory_space<vmem>>, %arg8: memref<1x64x128xf32, #tpu.memory_space<vmem>>) attributes {dimension_semantics = [#tpu.dimension_semantics<parallel>], iteration_bounds = array<i64: 2>, scalar_prefetch = 0 : i64, scratch_operands = 0 : i64, tpu.core_type = #tpu.core_type<tc>, window_params = [{transform_indices = @transform_0, window_bounds = array<i64: 1, 8, 8, 128>}, {pipeline_mode = #tpu.pipeline_mode<synchronous>, transform_indices = @transform_1, window_bounds = array<i64: 32, 64>}, {pipeline_mode = #tpu.pipeline_mode<synchronous>, transform_indices = @transform_2, window_bounds = array<i64: 128, 256>}, {pipeline_mode = #tpu.pipeline_mode<synchronous>, transform_indices = @transform_3, window_bounds = array<i64: 576, 64>}, {pipeline_mode = #tpu.pipeline_mode<synchronous>, transform_indices = @transform_4, window_bounds = array<i64: 1, 64>}, {pipeline_mode = #tpu.pipeline_mode<synchronous>, transform_indices = @transform_5, window_bounds = array<i64: 1, 256>}, {pipeline_mode = #tpu.pipeline_mode<synchronous>, transform_indices = @transform_6, window_bounds = array<i64: 1, 64>}, {transform_indices = @transform_7, window_bounds = array<i64: 1, 64, 128>}]} {
    %c0 = arith.constant 0 : index
    %c0_0 = arith.constant 0 : index
    %c0_1 = arith.constant 0 : index
    %c0_2 = arith.constant 0 : index
    %0 = vector.load %arg1[%c0, %c0_0, %c0_1, %c0_2] : memref<1x8x8x128xbf16, #tpu.memory_space<vmem>>, vector<1x8x8x128xbf16>
    %1 = vector.shape_cast %0 : vector<1x8x8x128xbf16> to vector<8x8x128xbf16>
    %2 = vector.shape_cast %1 : vector<8x8x128xbf16> to vector<64x128xbf16>
    %3 = vector.extract_strided_slice %2 {offsets = [0, 0], sizes = [64, 32], strides = [1, 1]} : vector<64x128xbf16> to vector<64x32xbf16>
    %4 = vector.extract_strided_slice %2 {offsets = [0, 32], sizes = [64, 32], strides = [1, 1]} : vector<64x128xbf16> to vector<64x32xbf16>
    %5 = arith.maximumf %3, %4 : vector<64x32xbf16>
    %6 = vector.extract_strided_slice %2 {offsets = [0, 64], sizes = [64, 32], strides = [1, 1]} : vector<64x128xbf16> to vector<64x32xbf16>
    %7 = vector.extract_strided_slice %2 {offsets = [0, 96], sizes = [64, 32], strides = [1, 1]} : vector<64x128xbf16> to vector<64x32xbf16>
    %8 = arith.maximumf %6, %7 : vector<64x32xbf16>
    %9 = arith.maximumf %5, %8 : vector<64x32xbf16>
    %c0_3 = arith.constant 0 : index
    %c0_4 = arith.constant 0 : index
    %10 = vector.load %arg2[%c0_3, %c0_4] : memref<32x64xbf16, #tpu.memory_space<vmem>>, vector<32x64xbf16>
    %cst = arith.constant dense<0.000000e+00> : vector<64x64xf32>
    %11 = tpu.matmul %9, %10, %cst {dimension_numbers = #tpu.dot_dimension_numbers<[1], [0], [0], [1], [0, 0, 1, 1], [], []>} : vector<64x32xbf16>, vector<32x64xbf16>, vector<64x64xf32> -> vector<64x64xf32>
    %c0_5 = arith.constant 0 : index
    %c0_6 = arith.constant 0 : index
    %12 = vector.load %arg5[%c0_5, %c0_6] : memref<1x64xf32, #tpu.memory_space<vmem>>, vector<1x64xf32>
    %13 = vector.shape_cast %12 : vector<1x64xf32> to vector<64xf32>
    %14 = vector.shape_cast %13 : vector<64xf32> to vector<1x64xf32>
    %15 = vector.broadcast %14 : vector<1x64xf32> to vector<64x64xf32>
    %16 = arith.addf %11, %15 : vector<64x64xf32>
    %cst_7 = arith.constant 3.000000e+00 : f32
    %17 = vector.broadcast %cst_7 : f32 to vector<64x64xf32>
    %18 = arith.addf %16, %17 : vector<64x64xf32>
    %cst_8 = arith.constant 0.000000e+00 : f32
    %cst_9 = arith.constant 6.000000e+00 : f32
    %19 = vector.broadcast %cst_8 : f32 to vector<64x64xf32>
    %20 = arith.maximumf %19, %18 : vector<64x64xf32>
    %21 = vector.broadcast %cst_9 : f32 to vector<64x64xf32>
    %22 = arith.minimumf %21, %20 : vector<64x64xf32>
    %23 = arith.mulf %16, %22 : vector<64x64xf32>
    %cst_10 = arith.constant 0.166666672 : f32
    %24 = vector.broadcast %cst_10 : f32 to vector<64x64xf32>
    %25 = arith.mulf %23, %24 : vector<64x64xf32>
    %c0_11 = arith.constant 0 : index
    %c0_12 = arith.constant 0 : index
    %26 = vector.load %arg3[%c0_11, %c0_12] : memref<128x256xbf16, #tpu.memory_space<vmem>>, vector<128x256xbf16>
    %cst_13 = arith.constant dense<0.000000e+00> : vector<64x256xf32>
    %27 = tpu.matmul %2, %26, %cst_13 {dimension_numbers = #tpu.dot_dimension_numbers<[1], [0], [0], [1], [0, 0, 1, 1], [], []>} : vector<64x128xbf16>, vector<128x256xbf16>, vector<64x256xf32> -> vector<64x256xf32>
    %c0_14 = arith.constant 0 : index
    %c0_15 = arith.constant 0 : index
    %28 = vector.load %arg6[%c0_14, %c0_15] : memref<1x256xf32, #tpu.memory_space<vmem>>, vector<1x256xf32>
    %29 = vector.shape_cast %28 : vector<1x256xf32> to vector<256xf32>
    %30 = vector.shape_cast %29 : vector<256xf32> to vector<1x256xf32>
    %31 = vector.broadcast %30 : vector<1x256xf32> to vector<64x256xf32>
    %32 = arith.addf %27, %31 : vector<64x256xf32>
    %cst_16 = arith.constant 3.000000e+00 : f32
    %33 = vector.broadcast %cst_16 : f32 to vector<64x256xf32>
    %34 = arith.addf %32, %33 : vector<64x256xf32>
    %cst_17 = arith.constant 0.000000e+00 : f32
    %cst_18 = arith.constant 6.000000e+00 : f32
    %35 = vector.broadcast %cst_17 : f32 to vector<64x256xf32>
    %36 = arith.maximumf %35, %34 : vector<64x256xf32>
    %37 = vector.broadcast %cst_18 : f32 to vector<64x256xf32>
    %38 = arith.minimumf %37, %36 : vector<64x256xf32>
    %39 = arith.mulf %32, %38 : vector<64x256xf32>
    %cst_19 = arith.constant 0.166666672 : f32
    %40 = vector.broadcast %cst_19 : f32 to vector<64x256xf32>
    %41 = arith.mulf %39, %40 : vector<64x256xf32>
    %42 = vector.shape_cast %41 : vector<64x256xf32> to vector<8x8x256xf32>
    %43 = vector.extract_strided_slice %42 {offsets = [0, 0, 0], sizes = [8, 8, 64], strides = [1, 1, 1]} : vector<8x8x256xf32> to vector<8x8x64xf32>
    %44 = vector.extract_strided_slice %42 {offsets = [0, 0, 64], sizes = [8, 8, 64], strides = [1, 1, 1]} : vector<8x8x256xf32> to vector<8x8x64xf32>
    %45 = vector.extract_strided_slice %42 {offsets = [0, 0, 128], sizes = [8, 8, 64], strides = [1, 1, 1]} : vector<8x8x256xf32> to vector<8x8x64xf32>
    %46 = vector.extract_strided_slice %42 {offsets = [0, 0, 192], sizes = [8, 8, 64], strides = [1, 1, 1]} : vector<8x8x256xf32> to vector<8x8x64xf32>
    %cst_20 = arith.constant 0.000000e+00 : f32
    %47 = vector.broadcast %cst_20 : f32 to vector<8x1x64xf32>
    %48 = vector.extract_strided_slice %46 {offsets = [0, 0, 0], sizes = [8, 7, 64], strides = [1, 1, 1]} : vector<8x8x64xf32> to vector<8x7x64xf32>
    %49 = tpu.concatenate %47, %48 in 1 : vector<8x1x64xf32>, vector<8x7x64xf32> -> vector<8x8x64xf32>
    %cst_21 = arith.constant 0.000000e+00 : f32
    %50 = vector.broadcast %cst_21 : f32 to vector<1x8x64xf32>
    %51 = vector.extract_strided_slice %49 {offsets = [0, 0, 0], sizes = [7, 8, 64], strides = [1, 1, 1]} : vector<8x8x64xf32> to vector<7x8x64xf32>
    %52 = tpu.concatenate %50, %51 in 0 : vector<1x8x64xf32>, vector<7x8x64xf32> -> vector<8x8x64xf32>
    %cst_22 = arith.constant 0.000000e+00 : f32
    %53 = vector.broadcast %cst_22 : f32 to vector<1x8x64xf32>
    %54 = vector.extract_strided_slice %45 {offsets = [0, 0, 0], sizes = [7, 8, 64], strides = [1, 1, 1]} : vector<8x8x64xf32> to vector<7x8x64xf32>
    %55 = tpu.concatenate %53, %54 in 0 : vector<1x8x64xf32>, vector<7x8x64xf32> -> vector<8x8x64xf32>
    %cst_23 = arith.constant 0.000000e+00 : f32
    %56 = vector.broadcast %cst_23 : f32 to vector<1x8x64xf32>
    %57 = vector.extract_strided_slice %46 {offsets = [0, 0, 0], sizes = [7, 8, 64], strides = [1, 1, 1]} : vector<8x8x64xf32> to vector<7x8x64xf32>
    %58 = tpu.concatenate %56, %57 in 0 : vector<1x8x64xf32>, vector<7x8x64xf32> -> vector<8x8x64xf32>
    %cst_24 = arith.constant 0.000000e+00 : f32
    %59 = vector.broadcast %cst_24 : f32 to vector<8x1x64xf32>
    %60 = vector.extract_strided_slice %44 {offsets = [0, 0, 0], sizes = [8, 7, 64], strides = [1, 1, 1]} : vector<8x8x64xf32> to vector<8x7x64xf32>
    %61 = tpu.concatenate %59, %60 in 1 : vector<8x1x64xf32>, vector<8x7x64xf32> -> vector<8x8x64xf32>
    %cst_25 = arith.constant 0.000000e+00 : f32
    %62 = vector.broadcast %cst_25 : f32 to vector<8x1x64xf32>
    %63 = vector.extract_strided_slice %46 {offsets = [0, 0, 0], sizes = [8, 7, 64], strides = [1, 1, 1]} : vector<8x8x64xf32> to vector<8x7x64xf32>
    %64 = tpu.concatenate %62, %63 in 1 : vector<8x1x64xf32>, vector<8x7x64xf32> -> vector<8x8x64xf32>
    %65 = tpu.concatenate %52, %55, %58, %61, %43, %44, %64, %45, %46 in 2 : vector<8x8x64xf32>, vector<8x8x64xf32>, vector<8x8x64xf32>, vector<8x8x64xf32>, vector<8x8x64xf32>, vector<8x8x64xf32>, vector<8x8x64xf32>, vector<8x8x64xf32>, vector<8x8x64xf32> -> vector<8x8x576xf32>
    %66 = vector.shape_cast %65 : vector<8x8x576xf32> to vector<64x576xf32>
    %67 = arith.truncf %66 : vector<64x576xf32> to vector<64x576xbf16>
    %c0_26 = arith.constant 0 : index
    %c0_27 = arith.constant 0 : index
    %68 = vector.load %arg4[%c0_26, %c0_27] : memref<576x64xbf16, #tpu.memory_space<vmem>>, vector<576x64xbf16>
    %cst_28 = arith.constant dense<0.000000e+00> : vector<64x64xf32>
    %69 = tpu.matmul %67, %68, %cst_28 {dimension_numbers = #tpu.dot_dimension_numbers<[1], [0], [0], [1], [0, 0, 1, 1], [], []>} : vector<64x576xbf16>, vector<576x64xbf16>, vector<64x64xf32> -> vector<64x64xf32>
    %c0_29 = arith.constant 0 : index
    %c0_30 = arith.constant 0 : index
    %70 = vector.load %arg7[%c0_29, %c0_30] : memref<1x64xf32, #tpu.memory_space<vmem>>, vector<1x64xf32>
    %71 = vector.shape_cast %70 : vector<1x64xf32> to vector<64xf32>
    %72 = vector.shape_cast %71 : vector<64xf32> to vector<1x64xf32>
    %73 = vector.broadcast %72 : vector<1x64xf32> to vector<64x64xf32>
    %74 = arith.addf %69, %73 : vector<64x64xf32>
    %cst_31 = arith.constant 3.000000e+00 : f32
    %75 = vector.broadcast %cst_31 : f32 to vector<64x64xf32>
    %76 = arith.addf %74, %75 : vector<64x64xf32>
    %cst_32 = arith.constant 0.000000e+00 : f32
    %cst_33 = arith.constant 6.000000e+00 : f32
    %77 = vector.broadcast %cst_32 : f32 to vector<64x64xf32>
    %78 = arith.maximumf %77, %76 : vector<64x64xf32>
    %79 = vector.broadcast %cst_33 : f32 to vector<64x64xf32>
    %80 = arith.minimumf %79, %78 : vector<64x64xf32>
    %81 = arith.mulf %74, %80 : vector<64x64xf32>
    %cst_34 = arith.constant 0.166666672 : f32
    %82 = vector.broadcast %cst_34 : f32 to vector<64x64xf32>
    %83 = arith.mulf %81, %82 : vector<64x64xf32>
    %84 = tpu.concatenate %83, %25 in 1 : vector<64x64xf32>, vector<64x64xf32> -> vector<64x128xf32>
    %c0_35 = arith.constant 0 : index
    %c0_36 = arith.constant 0 : index
    %c0_37 = arith.constant 0 : index
    %85 = vector.load %arg8[%c0_35, %c0_36, %c0_37] : memref<1x64x128xf32, #tpu.memory_space<vmem>>, vector<1x64x128xf32>
    %86 = vector.shape_cast %85 : vector<1x64x128xf32> to vector<64x128xf32>
    %87 = vector.shape_cast %84 : vector<64x128xf32> to vector<1x64x128xf32>
    tpu.vector_store %arg8[%c0_35, %c0_36, %c0_37], %87 {strides = array<i32>} : memref<1x64x128xf32, #tpu.memory_space<vmem>>, vector<1x64x128xf32>,
    return
  }
  func.func @transform_0(%arg0: i32) -> (i32, i32, i32, i32) {
    %c0_i32 = arith.constant 0 : i32
    %c0_i32_0 = arith.constant 0 : i32
    %c0_i32_1 = arith.constant 0 : i32
    %c0_i32_2 = arith.constant 0 : i32
    return %arg0, %c0_i32, %c0_i32_0, %c0_i32_1 : i32, i32, i32, i32
  }
  func.func @transform_1(%arg0: i32) -> (i32, i32) {
    %c0_i32 = arith.constant 0 : i32
    %c0_i32_0 = arith.constant 0 : i32
    %c0_i32_1 = arith.constant 0 : i32
    return %c0_i32, %c0_i32_0 : i32, i32
  }
  func.func @transform_2(%arg0: i32) -> (i32, i32) {
    %c0_i32 = arith.constant 0 : i32
    %c0_i32_0 = arith.constant 0 : i32
    %c0_i32_1 = arith.constant 0 : i32
    return %c0_i32, %c0_i32_0 : i32, i32
  }
  func.func @transform_3(%arg0: i32) -> (i32, i32) {
    %c0_i32 = arith.constant 0 : i32
    %c0_i32_0 = arith.constant 0 : i32
    %c0_i32_1 = arith.constant 0 : i32
    return %c0_i32, %c0_i32_0 : i32, i32
  }
  func.func @transform_4(%arg0: i32) -> (i32, i32) {
    %c0_i32 = arith.constant 0 : i32
    %c0_i32_0 = arith.constant 0 : i32
    %c0_i32_1 = arith.constant 0 : i32
    return %c0_i32, %c0_i32_0 : i32, i32
  }
  func.func @transform_5(%arg0: i32) -> (i32, i32) {
    %c0_i32 = arith.constant 0 : i32
    %c0_i32_0 = arith.constant 0 : i32
    %c0_i32_1 = arith.constant 0 : i32
    return %c0_i32, %c0_i32_0 : i32, i32
  }
  func.func @transform_6(%arg0: i32) -> (i32, i32) {
    %c0_i32 = arith.constant 0 : i32
    %c0_i32_0 = arith.constant 0 : i32
    %c0_i32_1 = arith.constant 0 : i32
    return %c0_i32, %c0_i32_0 : i32, i32
  }
  func.func @transform_7(%arg0: i32) -> (i32, i32, i32) {
    %c0_i32 = arith.constant 0 : i32
    %c0_i32_0 = arith.constant 0 : i32
    %c0_i32_1 = arith.constant 0 : i32
    return %arg0, %c0_i32, %c0_i32_0 : i32, i32, i32
  }
}

</mosaic_0001>

<llo_original>
// kernel: tb_forward.1
$region0: #{tb_forward.1}
  #allocation0 [shape = 'u32[]', space=smem, size = 0x4, offset = 0x4, fixed_abs, tag = 'smem constant byte address 0x4 - core index']
  #allocation1 [shape = 'u32[144,128]{1,0:T(1,128)}', space=vmem, size = 0x12000, scoped, tag = 'internal scratch']
  %s0 = inlined_call_operand.vmem [shape: bf16[2,8,8,128], index: 0, kind: input, shape index: {}]
  %s1 = inlined_call_operand.vmem [shape: bf16[32,64], index: 1, kind: input, shape index: {}]
  %s2 = inlined_call_operand.vmem [shape: bf16[128,256], index: 2, kind: input, shape index: {}]
  %s3 = inlined_call_operand.vmem [shape: bf16[576,64], index: 3, kind: input, shape index: {}]
  %s4 = inlined_call_operand.vmem [shape: f32[1,64], index: 4, kind: input, shape index: {}]
  %s5 = inlined_call_operand.vmem [shape: f32[1,256], index: 5, kind: input, shape index: {}]
  %s6 = inlined_call_operand.vmem [shape: f32[1,64], index: 6, kind: input, shape index: {}]
  %s7 = inlined_call_operand.hbm [shape: f32[2,64,128], index: 7, kind: output, shape index: {}]
  %s8 = sld [smem:[#allocation0]]
  $region61: #{tb_forward.1} parent=0
    _
  %s10 = ssub.s32 1, %s8
  %s11 = scalar_select 0, %s10, %s8
  $region1: #{tb_forward.1} parent=0
    #allocation2 [shape = 'u8[65536]{0}', space=vmem, size = 0x10000, scoped, tag = 'output window, operand 0']
    #allocation3 [shape = 's32[2]{0}', space=sflag, size = 0x8, scoped, tag = 'scoped memory for tb_forward.1']
    %12 = vsyncpa [#allocation3], 0
    %s13 = scalar_lea.sflag [#allocation3], 1
    %14 = vsyncpa %s13, 0
    loop: start=0, step=1, limit=4
    $region2: #{tb_forward.1} parent=1 // loop_pre_header
      _
    $region3: #{tb_forward.1} parent=1 // loop_header
      %s16 = sphi 0, %s20
      %p17 = scmp.ge.s32.totalorder %s16, 4
      %s26 = sphi 0, %s28
      %s29 = sphi 0, %s26
      %s30 = sphi 0, %s29
      %s46 = sphi 0, %s30
      %s50 = sphi 0, %s50
      %s52 = sphi 0, %s50
      %s53 = sphi 0, %s52
      %s67 = sphi 0, %s53
      %s71 = sphi 0, %s71
      %s73 = sphi 0, %s71
      %s74 = sphi 0, %s73
      %s88 = sphi 0, %s74
      %s92 = sphi 0, %s92
      %s94 = sphi 0, %s92
      %s95 = sphi 0, %s94
      %s109 = sphi 0, %s95
      %s113 = sphi 0, %s113
      %s115 = sphi 0, %s113
      %s116 = sphi 0, %s115
      %s130 = sphi 0, %s116
      %s134 = sphi 0, %s134
      %s136 = sphi 0, %s134
      %s137 = sphi 0, %s136
      %s151 = sphi 0, %s137
      %s155 = sphi 0, %s155
      %s157 = sphi 0, %s155
      %s158 = sphi 0, %s157
      %s172 = sphi 0, %s158
      %s178 = sphi 0, %s180
      %s181 = sphi 0, %s178
      %s182 = sphi 0, %s181
      %s198 = sphi 0, %s182
    $region4: #{tb_forward.1} parent=1 // loop_header_branch
      %19 = sbr.rel (%p17) target = $region8
    $region5: #{tb_forward.1} parent=1 // loop_body
      %s21 = ssub.s32 %s16, 1
      %s22 = ssub.s32 %s16, 2
      %s23 = sadd.s32 %s16, 1
      %s24 = ssub.s32 %s16, %s23
      %p25 = scmp.eq.s32.totalorder %s24, 0
      %s27 = sadd.s32 %s26, 1
      %s28 = scalar_select %p25, %s26, %s27
      %p31 = pneg %p25
      %p32 = scmp.eq.s32.totalorder %s16, 1
      %p33 = por %p31, %p32
      %p34 = scmp.ne.s32.totalorder %s26, %s29
      %p35 = scmp.eq.s32.totalorder %s16, 0
      %p36 = por %p34, %p35
      %p37 = scmp.ne.s32.totalorder %s26, %s29
      %p38 = scmp.eq.s32.totalorder %s21, 1
      %p39 = por %p37, %p38
      %p40 = scmp.ne.s32.totalorder %s29, %s30
      %p41 = scmp.eq.s32.totalorder %s21, 0
      %p42 = por %p40, %p41
      %p43 = scmp.ne.s32.totalorder %s29, %s30
      %p44 = scmp.eq.s32.totalorder %s22, 1
      %p45 = por %p43, %p44
      %p47 = scmp.ne.s32.totalorder %s30, %s46
      %p48 = scmp.eq.s32.totalorder %s22, 0
      %p49 = por %p47, %p48
      %s51 = sadd.s32 %s50, 1
      %p54 = scmp.eq.s32.totalorder %s16, 1
      %p55 = scmp.ne.s32.totalorder %s50, %s52
      %p56 = scmp.eq.s32.totalorder %s16, 0
      %p57 = por %p55, %p56
      %p58 = scmp.ne.s32.totalorder %s50, %s52
      %p59 = scmp.eq.s32.totalorder %s21, 1
      %p60 = por %p58, %p59
      %p61 = scmp.ne.s32.totalorder %s52, %s53
      %p62 = scmp.eq.s32.totalorder %s21, 0
      %p63 = por %p61, %p62
      %p64 = scmp.ne.s32.totalorder %s52, %s53
      %p65 = scmp.eq.s32.totalorder %s22, 1
      %p66 = por %p64, %p65
      %p68 = scmp.ne.s32.totalorder %s53, %s67
      %p69 = scmp.eq.s32.totalorder %s22, 0
      %p70 = por %p68, %p69
      %s72 = sadd.s32 %s71, 1
      %p75 = scmp.eq.s32.totalorder %s16, 1
      %p76 = scmp.ne.s32.totalorder %s71, %s73
      %p77 = scmp.eq.s32.totalorder %s16, 0
      %p78 = por %p76, %p77
      %p79 = scmp.ne.s32.totalorder %s71, %s73
      %p80 = scmp.eq.s32.totalorder %s21, 1
      %p81 = por %p79, %p80
      %p82 = scmp.ne.s32.totalorder %s73, %s74
      %p83 = scmp.eq.s32.totalorder %s21, 0
      %p84 = por %p82, %p83
      %p85 = scmp.ne.s32.totalorder %s73, %s74
      %p86 = scmp.eq.s32.totalorder %s22, 1
      %p87 = por %p85, %p86
      %p89 = scmp.ne.s32.totalorder %s74, %s88
      %p90 = scmp.eq.s32.totalorder %s22, 0
      %p91 = por %p89, %p90
      %s93 = sadd.s32 %s92, 1
      %p96 = scmp.eq.s32.totalorder %s16, 1
      %p97 = scmp.ne.s32.totalorder %s92, %s94
      %p98 = scmp.eq.s32.totalorder %s16, 0
      %p99 = por %p97, %p98
      %p100 = scmp.ne.s32.totalorder %s92, %s94
      %p101 = scmp.eq.s32.totalorder %s21, 1
      %p102 = por %p100, %p101
      %p103 = scmp.ne.s32.totalorder %s94, %s95
      %p104 = scmp.eq.s32.totalorder %s21, 0
      %p105 = por %p103, %p104
      %p106 = scmp.ne.s32.totalorder %s94, %s95
      %p107 = scmp.eq.s32.totalorder %s22, 1
      %p108 = por %p106, %p107
      %p110 = scmp.ne.s32.totalorder %s95, %s109
      %p111 = scmp.eq.s32.totalorder %s22, 0
      %p112 = por %p110, %p111
      %s114 = sadd.s32 %s113, 1
      %p117 = scmp.eq.s32.totalorder %s16, 1
      %p118 = scmp.ne.s32.totalorder %s113, %s115
      %p119 = scmp.eq.s32.totalorder %s16, 0
      %p120 = por %p118, %p119
      %p121 = scmp.ne.s32.totalorder %s113, %s115
      %p122 = scmp.eq.s32.totalorder %s21, 1
      %p123 = por %p121, %p122
      %p124 = scmp.ne.s32.totalorder %s115, %s116
      %p125 = scmp.eq.s32.totalorder %s21, 0
      %p126 = por %p124, %p125
      %p127 = scmp.ne.s32.totalorder %s115, %s116
      %p128 = scmp.eq.s32.totalorder %s22, 1
      %p129 = por %p127, %p128
      %p131 = scmp.ne.s32.totalorder %s116, %s130
      %p132 = scmp.eq.s32.totalorder %s22, 0
      %p133 = por %p131, %p132
      %s135 = sadd.s32 %s134, 1
      %p138 = scmp.eq.s32.totalorder %s16, 1
      %p139 = scmp.ne.s32.totalorder %s134, %s136
      %p140 = scmp.eq.s32.totalorder %s16, 0
      %p141 = por %p139, %p140
      %p142 = scmp.ne.s32.totalorder %s134, %s136
      %p143 = scmp.eq.s32.totalorder %s21, 1
      %p144 = por %p142, %p143
      %p145 = scmp.ne.s32.totalorder %s136, %s137
      %p146 = scmp.eq.s32.totalorder %s21, 0
      %p147 = por %p145, %p146
      %p148 = scmp.ne.s32.totalorder %s136, %s137
      %p149 = scmp.eq.s32.totalorder %s22, 1
      %p150 = por %p148, %p149
      %p152 = scmp.ne.s32.totalorder %s137, %s151
      %p153 = scmp.eq.s32.totalorder %s22, 0
      %p154 = por %p152, %p153
      %s156 = sadd.s32 %s155, 1
      %p159 = scmp.eq.s32.totalorder %s16, 1
      %p160 = scmp.ne.s32.totalorder %s155, %s157
      %p161 = scmp.eq.s32.totalorder %s16, 0
      %p162 = por %p160, %p161
      %p163 = scmp.ne.s32.totalorder %s155, %s157
      %p164 = scmp.eq.s32.totalorder %s21, 1
      %p165 = por %p163, %p164
      %p166 = scmp.ne.s32.totalorder %s157, %s158
      %p167 = scmp.eq.s32.totalorder %s21, 0
      %p168 = por %p166, %p167
      %p169 = scmp.ne.s32.totalorder %s157, %s158
      %p170 = scmp.eq.s32.totalorder %s22, 1
      %p171 = por %p169, %p170
      %p173 = scmp.ne.s32.totalorder %s158, %s172
      %p174 = scmp.eq.s32.totalorder %s22, 0
      %p175 = por %p173, %p174
      %s176 = ssub.s32 %s16, %s23
      %p177 = scmp.eq.s32.totalorder %s176, 0
      %s179 = sadd.s32 %s178, 1
      %s180 = scalar_select %p177, %s178, %s179
      %p183 = pneg %p177
      %p184 = scmp.eq.s32.totalorder %s16, 1
      %p185 = por %p183, %p184
      %p186 = scmp.ne.s32.totalorder %s178, %s181
      %p187 = scmp.eq.s32.totalorder %s16, 0
      %p188 = por %p186, %p187
      %p189 = scmp.ne.s32.totalorder %s178, %s181
      %p190 = scmp.eq.s32.totalorder %s21, 1
      %p191 = por %p189, %p190
      %p192 = scmp.ne.s32.totalorder %s181, %s182
      %p193 = scmp.eq.s32.totalorder %s21, 0
      %p194 = por %p192, %p193
      %p195 = scmp.ne.s32.totalorder %s181, %s182
      %p196 = scmp.eq.s32.totalorder %s22, 1
      %p197 = por %p195, %p196
      %p199 = scmp.ne.s32.totalorder %s182, %s198
      %p200 = scmp.eq.s32.totalorder %s22, 0
      %p201 = por %p199, %p200
      %p202 = scmp.le.s32.totalorder 1, %s16
      %p203 = scmp.lt.s32.totalorder %s16, 3
      %p204 = pnand %p202, %p203
      %p205 = pneg %p204
      // Predicated region
      $region9: #{tb_forward.1} parent=5 // pred_check
        _
      $region10: #{tb_forward.1} parent=5 // pred_check_branch
        %207 = sbr.rel (%p204) target = $region12
      $region11: #{tb_forward.1} parent=5 // pred_region
        %s208 = ssub.s32 %s16, 1
        // Predicated region
        $region13: #{tb_forward.1} parent=11 // pred_check
          %p209 = pneg %p63
        $region14: #{tb_forward.1} parent=11 // pred_check_branch
          %211 = sbr.rel (%p209) target = $region16
        $region15: #{tb_forward.1} parent=11 // pred_region
          _
        $region16: #{tb_forward.1} parent=11 // pred_fallthru
          _
        // Predicated region
        $region17: #{tb_forward.1} parent=11 // pred_check
          %p212 = pneg %p84
        $region18: #{tb_forward.1} parent=11 // pred_check_branch
          %214 = sbr.rel (%p212) target = $region20
        $region19: #{tb_forward.1} parent=11 // pred_region
          _
        $region20: #{tb_forward.1} parent=11 // pred_fallthru
          _
        // Predicated region
        $region21: #{tb_forward.1} parent=11 // pred_check
          %p215 = pneg %p105
        $region22: #{tb_forward.1} parent=11 // pred_check_branch
          %217 = sbr.rel (%p215) target = $region24
        $region23: #{tb_forward.1} parent=11 // pred_region
          _
        $region24: #{tb_forward.1} parent=11 // pred_fallthru
          _
        // Predicated region
        $region25: #{tb_forward.1} parent=11 // pred_check
          %p218 = pneg %p126
        $region26: #{tb_forward.1} parent=11 // pred_check_branch
          %220 = sbr.rel (%p218) target = $region28
        $region27: #{tb_forward.1} parent=11 // pred_region
          _
        $region28: #{tb_forward.1} parent=11 // pred_fallthru
          _
        // Predicated region
        $region29: #{tb_forward.1} parent=11 // pred_check
          %p221 = pneg %p147
        $region30: #{tb_forward.1} parent=11 // pred_check_branch
          %223 = sbr.rel (%p221) target = $region32
        $region31: #{tb_forward.1} parent=11 // pred_region
          _
        $region32: #{tb_forward.1} parent=11 // pred_fallthru
          _
        // Predicated region
        $region33: #{tb_forward.1} parent=11 // pred_check
          %p224 = pneg %p168
        $region34: #{tb_forward.1} parent=11 // pred_check_branch
          %226 = sbr.rel (%p224) target = $region36
        $region35: #{tb_forward.1} parent=11 // pred_region
          _
        $region36: #{tb_forward.1} parent=11 // pred_fallthru
          _
      $region12: #{tb_forward.1} parent=5 // pred_fallthru
        _
      %p227 = scmp.lt.s32.totalorder %s16, 2
      // Predicated region
      $region37: #{tb_forward.1} parent=5 // pred_check
        %p228 = pneg %p227
      $region38: #{tb_forward.1} parent=5 // pred_check_branch
        %230 = sbr.rel (%p228) target = $region40
      $region39: #{tb_forward.1} parent=5 // pred_region
        // Predicated region
        $region41: #{tb_forward.1} parent=39 // pred_check
          %p231 = pneg %p36
        $region42: #{tb_forward.1} parent=39 // pred_check_branch
          %233 = sbr.rel (%p231) target = $region44
        $region43: #{tb_forward.1} parent=39 // pred_region
          %p234 = scmp.lt.s32.totalorder %s16, 1
          %s235 = scalar_select %p234, %s16, 1
          %s236 = smul.addr %s235, 8
          %s237 = smul.addr %s236, 4
          %s238 = scalar_lea.vmem %s0, %s237
        $region44: #{tb_forward.1} parent=39 // pred_fallthru
          _
      $region40: #{tb_forward.1} parent=5 // pred_fallthru
        _
      %p239 = scmp.le.s32.totalorder 1, %s16
      %p240 = scmp.lt.s32.totalorder %s16, 3
      %p241 = pnand %p239, %p240
      %p242 = pneg %p241
      // Predicated region
      $region45: #{tb_forward.1} parent=5 // pred_check
        _
      $region46: #{tb_forward.1} parent=5 // pred_check_branch
        %244 = sbr.rel (%p241) target = $region48
      $region47: #{tb_forward.1} parent=5 // pred_region
        %s245 = ssub.s32 %s16, 1
        %p246 = scmp.lt.s32.totalorder %s21, 1
        %s247 = scalar_select %p246, %s21, 1
        %s248 = smul.addr %s247, 8
        %s249 = smul.addr %s248, 4
        %s250 = scalar_lea.vmem %s0, %s249
        %p251 = pneg %p42
        %p252 = pneg %p39
        %p253 = pneg %p63
        %p254 = pneg %p60
        %p255 = pneg %p84
        %p256 = pneg %p81
        %p257 = pneg %p105
        %p258 = pneg %p102
        %p259 = pneg %p126
        %p260 = pneg %p123
        %p261 = pneg %p147
        %p262 = pneg %p144
        %p263 = pneg %p168
        %p264 = pneg %p165
        %p265 = pneg %p194
        %p266 = pneg %p191
        %s267 = sand.u32 %s181, 1
        %s268 = scalar_lea.sflag [#allocation3], %s267
        %s269 = sand.u32 %s181, 1
        %s270 = smul.addr %s269, 64
        %s271 = scalar_lea.vmem [#allocation2], %s270
        %p272 = scmp.lt.s32.totalorder %s21, 1
        %s273 = scalar_select %p272, %s21, 1
        %s274 = smul.addr %s273, 8
        %s275 = smul.addr %s274, 4
        %s276 = scalar_lea.vmem %s0, %s275
        %v278 = vld [vmem:[%s276] sm:$0xf]
        %v279 = vld [vmem:[%s276 + $0x4] sm:$0xf]
        %v280 = vld [vmem:[%s276 + $0x8] sm:$0xf]
        %v281 = vld [vmem:[%s276 + $0xc] sm:$0xf]
        %v282 = vld [vmem:[%s276 + $0x10] sm:$0xf]
        %v283 = vld [vmem:[%s276 + $0x14] sm:$0xf]
        %v284 = vld [vmem:[%s276 + $0x18] sm:$0xf]
        %v285 = vld [vmem:[%s276 + $0x1c] sm:$0xf]
        %294 = vrot.lane.b32.xlu0 %v278, 96
        %v295 = vpop.permute.xlu0 %294
        %296 = vrot.lane.b32.xlu0 %v279, 96
        %v297 = vpop.permute.xlu0 %296
        %298 = vrot.lane.b32.xlu0 %v280, 96
        %v299 = vpop.permute.xlu0 %298
        %300 = vrot.lane.b32.xlu0 %v281, 96
        %v301 = vpop.permute.xlu0 %300
        %302 = vrot.lane.b32.xlu0 %v282, 96
        %v303 = vpop.permute.xlu0 %302
        %304 = vrot.lane.b32.xlu0 %v283, 96
        %v305 = vpop.permute.xlu0 %304
        %306 = vrot.lane.b32.xlu0 %v284, 96
        %v307 = vpop.permute.xlu0 %306
        %308 = vrot.lane.b32.xlu0 %v285, 96
        %v309 = vpop.permute.xlu0 %308
        %v318 = vmax.bf16 %v278, %v295
        %v319 = vmax.bf16 %v279, %v297
        %v320 = vmax.bf16 %v280, %v299
        %v321 = vmax.bf16 %v281, %v301
        %v322 = vmax.bf16 %v282, %v303
        %v323 = vmax.bf16 %v283, %v305
        %v324 = vmax.bf16 %v284, %v307
        %v325 = vmax.bf16 %v285, %v309
        %334 = vrot.lane.b32.xlu0 %v318, 64
        %v335 = vpop.permute.xlu0 %334
        %336 = vrot.lane.b32.xlu0 %v319, 64
        %v337 = vpop.permute.xlu0 %336
        %338 = vrot.lane.b32.xlu0 %v320, 64
        %v339 = vpop.permute.xlu0 %338
        %340 = vrot.lane.b32.xlu0 %v321, 64
        %v341 = vpop.permute.xlu0 %340
        %342 = vrot.lane.b32.xlu0 %v322, 64
        %v343 = vpop.permute.xlu0 %342
        %344 = vrot.lane.b32.xlu0 %v323, 64
        %v345 = vpop.permute.xlu0 %344
        %346 = vrot.lane.b32.xlu0 %v324, 64
        %v347 = vpop.permute.xlu0 %346
        %348 = vrot.lane.b32.xlu0 %v325, 64
        %v349 = vpop.permute.xlu0 %348
        %v358 = vmax.bf16 %v318, %v335
        %v359 = vmax.bf16 %v319, %v337
        %v360 = vmax.bf16 %v320, %v339
        %v361 = vmax.bf16 %v321, %v341
        %v362 = vmax.bf16 %v322, %v343
        %v363 = vmax.bf16 %v323, %v345
        %v364 = vmax.bf16 %v324, %v347
        %v365 = vmax.bf16 %v325, %v349
        %v366 = vld [vmem:[%s1] sm:$0xf]
        %v367 = vld [vmem:[%s1 + $0x4] sm:$0xf]
        %v368 = vld [vmem:[%s1 + $0x8] sm:$0xf]
        %v369 = vld [vmem:[%s1 + $0xc] sm:$0xf]
        %v370 = vld [vmem:[%s4] sm:$0x1]
        %v372 = vlaneseq
        %v373 = vshrl.u32 %v372, 7
        %v374 = vsub.s32 0, %v373
        %v375 = vrot.slane %v370, %v374
        %v385 = vunpack.c.l.b16 %v358
        %v386 = vunpack.c.l.b16 %v359
        %v387 = vunpack.c.l.b16 %v360
        %v388 = vunpack.c.l.b16 %v361
        %v389 = vunpack.c.l.b16 %v362
        %v390 = vunpack.c.l.b16 %v363
        %v391 = vunpack.c.l.b16 %v364
        %v392 = vunpack.c.l.b16 %v365
        %v393 = vpack.c.b16 %v386, %v385
        %v394 = vpack.c.b16 %v388, %v387
        %v395 = vpack.c.b16 %v390, %v389
        %v396 = vpack.c.b16 %v392, %v391
        %v401 = vunpack.c.l.b16 %v366
        %v402 = vunpack.c.l.b16 %v367
        %v403 = vunpack.c.l.b16 %v368
        %v404 = vunpack.c.l.b16 %v369
        %v405 = vpack.c.b16 %v402, %v401
        %v406 = vpack.c.b16 %v404, %v403
        %vm409 = vcmask 261120
        %v411 = vsel %vm409, %v393, 0
        %v414 = vsel %vm409, %v394, 0
        %v417 = vsel %vm409, %v395, 0
        %v420 = vsel %vm409, %v396, 0
        %422 = vmatprep.subr.bf16.mxu0 0
        %423 = vmatpush1.bf16.msra.mxu0 %v405
        %424 = vmatprep.subr.bf16.mxu0 0
        %425 = vmatpush1.bf16.msra.mxu0 %v406
        %426 = vmatprep.subr.bf16.mxu0 0
        %427 = vmatpush1.bf16.msra.mxu0 0
        %428 = vmatprep.subr.bf16.mxu0 0
        %429 = vmatpush1.bf16.msra.mxu0 0
        %430 = vmatprep.subr.bf16.mxu0 0
        %431 = vmatpush1.bf16.msra.mxu0 0
        %432 = vmatprep.subr.bf16.mxu0 0
        %433 = vmatpush1.bf16.msra.mxu0 0
        %434 = vmatprep.subr.bf16.mxu0 0
        %435 = vmatpush1.bf16.msra.mxu0 0
        %436 = vmatprep.subr.bf16.mxu0 0
        %437 = vmatpush1.bf16.msra.mxu0 0
        %438 = vmatprep.subr.bf16.mxu0 0
        %439 = vmatpush1.bf16.msra.mxu0 0
        %440 = vmatprep.subr.bf16.mxu0 0
        %441 = vmatpush1.bf16.msra.mxu0 0
        %442 = vmatprep.subr.bf16.mxu0 0
        %443 = vmatpush1.bf16.msra.mxu0 0
        %444 = vmatprep.subr.bf16.mxu0 0
        %445 = vmatpush1.bf16.msra.mxu0 0
        %446 = vmatprep.subr.bf16.mxu0 0
        %447 = vmatpush1.bf16.msra.mxu0 0
        %448 = vmatprep.subr.bf16.mxu0 0
        %449 = vmatpush1.bf16.msra.mxu0 0
        %450 = vmatprep.subr.bf16.mxu0 0
        %451 = vmatpush1.bf16.msra.mxu0 0
        %452 = vmatprep.subr.bf16.mxu0 0
        %453 = vmatpush1.bf16.msra.mxu0 0
        %454 = vmatprep.mubr.bf16.mxu0 0
        %455 = vmatmul.mubr.bf16.gmra.mrb[0].mxu0 %v411
        %v456 = vpop.f32.mrb[0].mxu0
        %v457 = vadd.f32 %v375, %v456
        %v458 = vpop.f32.mrb[0].mxu0
        %v459 = vpop.f32.mrb[0].mxu0
        %v460 = vadd.f32 %v375, %v459
        %v461 = vpop.f32.mrb[0].mxu0
        %462 = vmatprep.mubr.bf16.mxu0 0
        %463 = vmatmul.mubr.bf16.gmra.mrb[0].mxu0 %v414
        %v464 = vpop.f32.mrb[0].mxu0
        %v465 = vadd.f32 %v375, %v464
        %v466 = vpop.f32.mrb[0].mxu0
        %v467 = vpop.f32.mrb[0].mxu0
        %v468 = vadd.f32 %v375, %v467
        %v469 = vpop.f32.mrb[0].mxu0
        %470 = vmatprep.mubr.bf16.mxu0 0
        %471 = vmatmul.mubr.bf16.gmra.mrb[0].mxu0 %v417
        %v472 = vpop.f32.mrb[0].mxu0
        %v473 = vadd.f32 %v375, %v472
        %v474 = vpop.f32.mrb[0].mxu0
        %v475 = vpop.f32.mrb[0].mxu0
        %v476 = vadd.f32 %v375, %v475
        %v477 = vpop.f32.mrb[0].mxu0
        %478 = vmatprep.mubr.bf16.mxu0 0
        %479 = vmatmul.mubr.bf16.gmra.mrb[0].mxu0 %v420
        %v480 = vpop.f32.mrb[0].mxu0
        %v481 = vadd.f32 %v375, %v480
        %v482 = vpop.f32.mrb[0].mxu0
        %v483 = vpop.f32.mrb[0].mxu0
        %v484 = vadd.f32 %v375, %v483
        %v485 = vpop.f32.mrb[0].mxu0
        %486 = vdwg.mxu0
        %v487 = vadd.f32 %v457, 3.0
        %v488 = vadd.f32 %v460, 3.0
        %v489 = vadd.f32 %v465, 3.0
        %v490 = vadd.f32 %v468, 3.0
        %v491 = vadd.f32 %v473, 3.0
        %v492 = vadd.f32 %v476, 3.0
        %v493 = vadd.f32 %v481, 3.0
        %v494 = vadd.f32 %v484, 3.0
        %v495 = vmax.f32 %v487, 0.0
        %v496 = vmax.f32 %v488, 0.0
        %v497 = vmax.f32 %v489, 0.0
        %v498 = vmax.f32 %v490, 0.0
        %v499 = vmax.f32 %v491, 0.0
        %v500 = vmax.f32 %v492, 0.0
        %v501 = vmax.f32 %v493, 0.0
        %v502 = vmax.f32 %v494, 0.0
        %v503 = vmin.f32 %v495, 6.0
        %v504 = vmin.f32 %v496, 6.0
        %v505 = vmin.f32 %v497, 6.0
        %v506 = vmin.f32 %v498, 6.0
        %v507 = vmin.f32 %v499, 6.0
        %v508 = vmin.f32 %v500, 6.0
        %v509 = vmin.f32 %v501, 6.0
        %v510 = vmin.f32 %v502, 6.0
        %v511 = vmul.f32 %v457, %v503
        %v512 = vmul.f32 %v460, %v504
        %v513 = vmul.f32 %v465, %v505
        %v514 = vmul.f32 %v468, %v506
        %v515 = vmul.f32 %v473, %v507
        %v516 = vmul.f32 %v476, %v508
        %v517 = vmul.f32 %v481, %v509
        %v518 = vmul.f32 %v484, %v510
        %v519 = vmul.f32 %v511, 0.16666667
        %v520 = vmul.f32 %v512, 0.16666667
        %v521 = vmul.f32 %v513, 0.16666667
        %v522 = vmul.f32 %v514, 0.16666667
        %v523 = vmul.f32 %v515, 0.16666667
        %v524 = vmul.f32 %v516, 0.16666667
        %v525 = vmul.f32 %v517, 0.16666667
        %v526 = vmul.f32 %v518, 0.16666667
        %v527 = vld [vmem:[%s2] sm:$0xff]
        %v528 = vld [vmem:[%s2 + $0x8] sm:$0xff]
        %v529 = vld [vmem:[%s2 + $0x10] sm:$0xff]
        %v530 = vld [vmem:[%s2 + $0x18] sm:$0xff]
        %v531 = vld [vmem:[%s2 + $0x20] sm:$0xff]
        %v532 = vld [vmem:[%s2 + $0x28] sm:$0xff]
        %v533 = vld [vmem:[%s2 + $0x30] sm:$0xff]
        %v534 = vld [vmem:[%s2 + $0x38] sm:$0xff]
        %v535 = vld [vmem:[%s2 + $0x40] sm:$0xff]
        %v536 = vld [vmem:[%s2 + $0x48] sm:$0xff]
        %v537 = vld [vmem:[%s2 + $0x50] sm:$0xff]
        %v538 = vld [vmem:[%s2 + $0x58] sm:$0xff]
        %v539 = vld [vmem:[%s2 + $0x60] sm:$0xff]
        %v540 = vld [vmem:[%s2 + $0x68] sm:$0xff]
        %v541 = vld [vmem:[%s2 + $0x70] sm:$0xff]
        %v542 = vld [vmem:[%s2 + $0x78] sm:$0xff]
        %v543 = vld [vmem:[%s5] sm:$0x3]
        %v545 = vlaneseq
        %v546 = vshrl.u32 %v545, 7
        %v547 = vsub.s32 0, %v546
        %v548 = vrot.slane %v543, %v547
        %v549 = vlaneseq
        %v550 = vshrl.u32 %v549, 7
        %v551 = vsub.s32 1, %v550
        %v552 = vrot.slane %v543, %v551
        %v555 = vunpack.c.l.b16 %v278
        %v556 = vunpack.c.l.b16 %v279
        %v557 = vunpack.c.l.b16 %v280
        %v558 = vunpack.c.l.b16 %v281
        %v559 = vunpack.c.l.b16 %v282
        %v560 = vunpack.c.l.b16 %v283
        %v561 = vunpack.c.l.b16 %v284
        %v562 = vunpack.c.l.b16 %v285
        %v563 = vpack.c.b16 %v556, %v555
        %v564 = vpack.c.b16 %v558, %v557
        %v565 = vpack.c.b16 %v560, %v559
        %v566 = vpack.c.b16 %v562, %v561
        %v587 = vunpack.c.l.b16 %v527
        %v588 = vunpack.c.h.b16 %v527
        %v589 = vunpack.c.l.b16 %v528
        %v590 = vunpack.c.h.b16 %v528
        %v591 = vunpack.c.l.b16 %v529
        %v592 = vunpack.c.h.b16 %v529
        %v593 = vunpack.c.l.b16 %v530
        %v594 = vunpack.c.h.b16 %v530
        %v595 = vunpack.c.l.b16 %v531
        %v596 = vunpack.c.h.b16 %v531
        %v597 = vunpack.c.l.b16 %v532
        %v598 = vunpack.c.h.b16 %v532
        %v599 = vunpack.c.l.b16 %v533
        %v600 = vunpack.c.h.b16 %v533
        %v601 = vunpack.c.l.b16 %v534
        %v602 = vunpack.c.h.b16 %v534
        %v603 = vunpack.c.l.b16 %v535
        %v604 = vunpack.c.h.b16 %v535
        %v605 = vunpack.c.l.b16 %v536
        %v606 = vunpack.c.h.b16 %v536
        %v607 = vunpack.c.l.b16 %v537
        %v608 = vunpack.c.h.b16 %v537
        %v609 = vunpack.c.l.b16 %v538
        %v610 = vunpack.c.h.b16 %v538
        %v611 = vunpack.c.l.b16 %v539
        %v612 = vunpack.c.h.b16 %v539
        %v613 = vunpack.c.l.b16 %v540
        %v614 = vunpack.c.h.b16 %v540
        %v615 = vunpack.c.l.b16 %v541
        %v616 = vunpack.c.h.b16 %v541
        %v617 = vunpack.c.l.b16 %v542
        %v618 = vunpack.c.h.b16 %v542
        %v619 = vpack.c.b16 %v589, %v587
        %v620 = vpack.c.b16 %v590, %v588
        %v621 = vpack.c.b16 %v593, %v591
        %v622 = vpack.c.b16 %v594, %v592
        %v623 = vpack.c.b16 %v597, %v595
        %v624 = vpack.c.b16 %v598, %v596
        %v625 = vpack.c.b16 %v601, %v599
        %v626 = vpack.c.b16 %v602, %v600
        %v627 = vpack.c.b16 %v605, %v603
        %v628 = vpack.c.b16 %v606, %v604
        %v629 = vpack.c.b16 %v609, %v607
        %v630 = vpack.c.b16 %v610, %v608
        %v631 = vpack.c.b16 %v613, %v611
        %v632 = vpack.c.b16 %v614, %v612
        %v633 = vpack.c.b16 %v617, %v615
        %v634 = vpack.c.b16 %v618, %v616
        %651 = vmatprep.subr.bf16.mxu0 %v620
        %652 = vmatpush1.bf16.msra.mxu0 %v619
        %653 = vmatprep.subr.bf16.mxu0 %v622
        %654 = vmatpush1.bf16.msra.mxu0 %v621
        %655 = vmatprep.subr.bf16.mxu0 %v624
        %656 = vmatpush1.bf16.msra.mxu0 %v623
        %657 = vmatprep.subr.bf16.mxu0 %v626
        %658 = vmatpush1.bf16.msra.mxu0 %v625
        %659 = vmatprep.subr.bf16.mxu0 %v628
        %660 = vmatpush1.bf16.msra.mxu0 %v627
        %661 = vmatprep.subr.bf16.mxu0 %v630
        %662 = vmatpush1.bf16.msra.mxu0 %v629
        %663 = vmatprep.subr.bf16.mxu0 %v632
        %664 = vmatpush1.bf16.msra.mxu0 %v631
        %665 = vmatprep.subr.bf16.mxu0 %v634
        %666 = vmatpush1.bf16.msra.mxu0 %v633
        %667 = vmatprep.subr.bf16.mxu0 0
        %668 = vmatpush1.bf16.msra.mxu0 0
        %669 = vmatprep.subr.bf16.mxu0 0
        %670 = vmatpush1.bf16.msra.mxu0 0
        %671 = vmatprep.subr.bf16.mxu0 0
        %672 = vmatpush1.bf16.msra.mxu0 0
        %673 = vmatprep.subr.bf16.mxu0 0
        %674 = vmatpush1.bf16.msra.mxu0 0
        %675 = vmatprep.subr.bf16.mxu0 0
        %676 = vmatpush1.bf16.msra.mxu0 0
        %677 = vmatprep.subr.bf16.mxu0 0
        %678 = vmatpush1.bf16.msra.mxu0 0
        %679 = vmatprep.subr.bf16.mxu0 0
        %680 = vmatpush1.bf16.msra.mxu0 0
        %681 = vmatprep.subr.bf16.mxu0 0
        %682 = vmatpush1.bf16.msra.mxu0 0
        %683 = vmatprep.mubr.bf16.mxu0 0
        %684 = vmatmul.mubr.bf16.gmra.mrb[0].mxu0 %v563
        %v685 = vpop.f32.mrb[0].mxu0
        %v686 = vadd.f32 %v548, %v685
        %v687 = vpop.f32.mrb[0].mxu0
        %v688 = vadd.f32 %v552, %v687
        %v689 = vpop.f32.mrb[0].mxu0
        %v690 = vadd.f32 %v548, %v689
        %v691 = vpop.f32.mrb[0].mxu0
        %v692 = vadd.f32 %v552, %v691
        %693 = vmatprep.mubr.bf16.mxu0 0
        %694 = vmatmul.mubr.bf16.gmra.mrb[0].mxu0 %v564
        %v695 = vpop.f32.mrb[0].mxu0
        %v696 = vadd.f32 %v548, %v695
        %v697 = vpop.f32.mrb[0].mxu0
        %v698 = vadd.f32 %v552, %v697
        %v699 = vpop.f32.mrb[0].mxu0
        %v700 = vadd.f32 %v548, %v699
        %v701 = vpop.f32.mrb[0].mxu0
        %v702 = vadd.f32 %v552, %v701
        %703 = vmatprep.mubr.bf16.mxu0 0
        %704 = vmatmul.mubr.bf16.gmra.mrb[0].mxu0 %v565
        %v705 = vpop.f32.mrb[0].mxu0
        %v706 = vadd.f32 %v548, %v705
        %v707 = vpop.f32.mrb[0].mxu0
        %v708 = vadd.f32 %v552, %v707
        %v709 = vpop.f32.mrb[0].mxu0
        %v710 = vadd.f32 %v548, %v709
        %v711 = vpop.f32.mrb[0].mxu0
        %v712 = vadd.f32 %v552, %v711
        %713 = vmatprep.mubr.bf16.mxu0 0
        %714 = vmatmul.mubr.bf16.gmra.mrb[0].mxu0 %v566
        %v715 = vpop.f32.mrb[0].mxu0
        %v716 = vadd.f32 %v548, %v715
        %v717 = vpop.f32.mrb[0].mxu0
        %v718 = vadd.f32 %v552, %v717
        %v719 = vpop.f32.mrb[0].mxu0
        %v720 = vadd.f32 %v548, %v719
        %v721 = vpop.f32.mrb[0].mxu0
        %v722 = vadd.f32 %v552, %v721
        %723 = vdwg.mxu0
        %v724 = vadd.f32 %v686, 3.0
        %v725 = vadd.f32 %v688, 3.0
        %v726 = vadd.f32 %v690, 3.0
        %v727 = vadd.f32 %v692, 3.0
        %v728 = vadd.f32 %v696, 3.0
        %v729 = vadd.f32 %v698, 3.0
        %v730 = vadd.f32 %v700, 3.0
        %v731 = vadd.f32 %v702, 3.0
        %v732 = vadd.f32 %v706, 3.0
        %v733 = vadd.f32 %v708, 3.0
        %v734 = vadd.f32 %v710, 3.0
        %v735 = vadd.f32 %v712, 3.0
        %v736 = vadd.f32 %v716, 3.0
        %v737 = vadd.f32 %v718, 3.0
        %v738 = vadd.f32 %v720, 3.0
        %v739 = vadd.f32 %v722, 3.0
        %v740 = vmax.f32 %v724, 0.0
        %v741 = vmax.f32 %v725, 0.0
        %v742 = vmax.f32 %v726, 0.0
        %v743 = vmax.f32 %v727, 0.0
        %v744 = vmax.f32 %v728, 0.0
        %v745 = vmax.f32 %v729, 0.0
        %v746 = vmax.f32 %v730, 0.0
        %v747 = vmax.f32 %v731, 0.0
        %v748 = vmax.f32 %v732, 0.0
        %v749 = vmax.f32 %v733, 0.0
        %v750 = vmax.f32 %v734, 0.0
        %v751 = vmax.f32 %v735, 0.0
        %v752 = vmax.f32 %v736, 0.0
        %v753 = vmax.f32 %v737, 0.0
        %v754 = vmax.f32 %v738, 0.0
        %v755 = vmax.f32 %v739, 0.0
        %v756 = vmin.f32 %v740, 6.0
        %v757 = vmin.f32 %v741, 6.0
        %v758 = vmin.f32 %v742, 6.0
        %v759 = vmin.f32 %v743, 6.0
        %v760 = vmin.f32 %v744, 6.0
        %v761 = vmin.f32 %v745, 6.0
        %v762 = vmin.f32 %v746, 6.0
        %v763 = vmin.f32 %v747, 6.0
        %v764 = vmin.f32 %v748, 6.0
        %v765 = vmin.f32 %v749, 6.0
        %v766 = vmin.f32 %v750, 6.0
        %v767 = vmin.f32 %v751, 6.0
        %v768 = vmin.f32 %v752, 6.0
        %v769 = vmin.f32 %v753, 6.0
        %v770 = vmin.f32 %v754, 6.0
        %v771 = vmin.f32 %v755, 6.0
        %v772 = vmul.f32 %v686, %v756
        %v773 = vmul.f32 %v688, %v757
        %v774 = vmul.f32 %v690, %v758
        %v775 = vmul.f32 %v692, %v759
        %v776 = vmul.f32 %v696, %v760
        %v777 = vmul.f32 %v698, %v761
        %v778 = vmul.f32 %v700, %v762
        %v779 = vmul.f32 %v702, %v763
        %v780 = vmul.f32 %v706, %v764
        %v781 = vmul.f32 %v708, %v765
        %v782 = vmul.f32 %v710, %v766
        %v783 = vmul.f32 %v712, %v767
        %v784 = vmul.f32 %v716, %v768
        %v785 = vmul.f32 %v718, %v769
        %v786 = vmul.f32 %v720, %v770
        %v787 = vmul.f32 %v722, %v771
        %v788 = vmul.f32 %v772, 0.16666667
        %v789 = vmul.f32 %v773, 0.16666667
        %v790 = vmul.f32 %v774, 0.16666667
        %v791 = vmul.f32 %v775, 0.16666667
        %v792 = vmul.f32 %v776, 0.16666667
        %v793 = vmul.f32 %v777, 0.16666667
        %v794 = vmul.f32 %v778, 0.16666667
        %v795 = vmul.f32 %v779, 0.16666667
        %v796 = vmul.f32 %v780, 0.16666667
        %v797 = vmul.f32 %v781, 0.16666667
        %v798 = vmul.f32 %v782, 0.16666667
        %v799 = vmul.f32 %v783, 0.16666667
        %v800 = vmul.f32 %v784, 0.16666667
        %v801 = vmul.f32 %v785, 0.16666667
        %v802 = vmul.f32 %v786, 0.16666667
        %v803 = vmul.f32 %v787, 0.16666667
        %v812 = vrot.slane %v789, 7
        %v813 = vrot.slane %v791, 7
        %v814 = vrot.slane %v793, 7
        %v815 = vrot.slane %v795, 7
        %v816 = vrot.slane %v797, 7
        %v817 = vrot.slane %v799, 7
        %v818 = vrot.slane %v801, 7
        %v819 = vrot.slane %v803, 7
        %820 = vrot.lane.b32.xlu0 %v812, 64
        %v821 = vpop.permute.xlu0 %820
        %822 = vrot.lane.b32.xlu0 %v813, 64
        %v823 = vpop.permute.xlu0 %822
        %824 = vrot.lane.b32.xlu0 %v814, 64
        %v825 = vpop.permute.xlu0 %824
        %826 = vrot.lane.b32.xlu0 %v815, 64
        %v827 = vpop.permute.xlu0 %826
        %828 = vrot.lane.b32.xlu0 %v816, 64
        %v829 = vpop.permute.xlu0 %828
        %830 = vrot.lane.b32.xlu0 %v817, 64
        %v831 = vpop.permute.xlu0 %830
        %832 = vrot.lane.b32.xlu0 %v818, 64
        %v833 = vpop.permute.xlu0 %832
        %834 = vrot.lane.b32.xlu0 %v819, 64
        %v835 = vpop.permute.xlu0 %834
        %vm844 = vcmask 1040384
        %v845 = vsel %vm844, 0.0, %v821
        %v846 = vsel %vm844, 0.0, %v823
        %v847 = vsel %vm844, 0.0, %v825
        %v848 = vsel %vm844, 0.0, %v827
        %v849 = vsel %vm844, 0.0, %v829
        %v850 = vsel %vm844, 0.0, %v831
        %v851 = vsel %vm844, 0.0, %v833
        %v852 = vsel %vm844, 0.0, %v835
        %853 = vrot.lane.b32.xlu0 %v789, 64
        %v854 = vpop.permute.xlu0 %853
        %855 = vrot.lane.b32.xlu0 %v791, 64
        %v856 = vpop.permute.xlu0 %855
        %857 = vrot.lane.b32.xlu0 %v793, 64
        %v858 = vpop.permute.xlu0 %857
        %859 = vrot.lane.b32.xlu0 %v795, 64
        %v860 = vpop.permute.xlu0 %859
        %861 = vrot.lane.b32.xlu0 %v797, 64
        %v862 = vpop.permute.xlu0 %861
        %863 = vrot.lane.b32.xlu0 %v799, 64
        %v864 = vpop.permute.xlu0 %863
        %865 = vrot.lane.b32.xlu0 %v801, 64
        %v866 = vpop.permute.xlu0 %865
        %v882 = vrot.slane %v788, 7
        %v883 = vrot.slane %v790, 7
        %v884 = vrot.slane %v792, 7
        %v885 = vrot.slane %v794, 7
        %v886 = vrot.slane %v796, 7
        %v887 = vrot.slane %v798, 7
        %v888 = vrot.slane %v800, 7
        %v889 = vrot.slane %v802, 7
        %890 = vrot.lane.b32.xlu0 %v882, 64
        %v891 = vpop.permute.xlu0 %890
        %892 = vrot.lane.b32.xlu0 %v883, 64
        %v893 = vpop.permute.xlu0 %892
        %894 = vrot.lane.b32.xlu0 %v884, 64
        %v895 = vpop.permute.xlu0 %894
        %896 = vrot.lane.b32.xlu0 %v885, 64
        %v897 = vpop.permute.xlu0 %896
        %898 = vrot.lane.b32.xlu0 %v886, 64
        %v899 = vpop.permute.xlu0 %898
        %900 = vrot.lane.b32.xlu0 %v887, 64
        %v901 = vpop.permute.xlu0 %900
        %902 = vrot.lane.b32.xlu0 %v888, 64
        %v903 = vpop.permute.xlu0 %902
        %904 = vrot.lane.b32.xlu0 %v889, 64
        %v905 = vpop.permute.xlu0 %904
        %v914 = vsel %vm844, 0.0, %v891
        %v915 = vsel %vm844, 0.0, %v893
        %v916 = vsel %vm844, 0.0, %v895
        %v917 = vsel %vm844, 0.0, %v897
        %v918 = vsel %vm844, 0.0, %v899
        %v919 = vsel %vm844, 0.0, %v901
        %v920 = vsel %vm844, 0.0, %v903
        %v921 = vsel %vm844, 0.0, %v905
        %923 = vrot.lane.b32.xlu0 0.0, 64
        %v924 = vpop.permute.xlu0 %923
        %934 = vrot.lane.b32.xlu0 %v914, 64
        %v935 = vpop.permute.xlu0 %934
        %936 = vrot.lane.b32.xlu0 %v915, 64
        %v937 = vpop.permute.xlu0 %936
        %938 = vrot.lane.b32.xlu0 %v916, 64
        %v939 = vpop.permute.xlu0 %938
        %940 = vrot.lane.b32.xlu0 %v917, 64
        %v941 = vpop.permute.xlu0 %940
        %942 = vrot.lane.b32.xlu0 %v918, 64
        %v943 = vpop.permute.xlu0 %942
        %944 = vrot.lane.b32.xlu0 %v919, 64
        %v945 = vpop.permute.xlu0 %944
        %946 = vrot.lane.b32.xlu0 %v920, 64
        %v947 = vpop.permute.xlu0 %946
        %948 = vrot.lane.b32.xlu0 %v921, 64
        %v949 = vpop.permute.xlu0 %948
        %958 = vrot.lane.b32.xlu0 %v803, 64
        %v959 = vpop.permute.xlu0 %958
        %vm961 = vcmask 523264
        %v962 = vsel %vm961, 0.0, %v924
        %v963 = vsel %vm961, %v845, %v854
        %v964 = vsel %vm961, %v846, %v856
        %v965 = vsel %vm961, %v847, %v858
        %v966 = vsel %vm961, %v848, %v860
        %v967 = vsel %vm961, %v849, %v862
        %v968 = vsel %vm961, %v850, %v864
        %v969 = vsel %vm961, %v851, %v866
        %v970 = vsel %vm961, 0.0, %v935
        %v971 = vsel %vm961, %v854, %v937
        %v972 = vsel %vm961, %v856, %v939
        %v973 = vsel %vm961, %v858, %v941
        %v974 = vsel %vm961, %v860, %v943
        %v975 = vsel %vm961, %v862, %v945
        %v976 = vsel %vm961, %v864, %v947
        %v977 = vsel %vm961, %v866, %v949
        %v978 = vsel %vm961, %v852, %v959
        %v979 = vpack.c.bf16 %v963, %v962
        %v980 = vpack.c.bf16 %v971, %v970
        %v981 = vpack.c.bf16 %v790, %v788
        %v982 = vpack.c.bf16 %v964, %v963
        %v983 = vpack.c.bf16 %v856, %v854
        %v984 = vpack.c.bf16 %v965, %v964
        %v985 = vpack.c.bf16 %v973, %v972
        %v986 = vpack.c.bf16 %v794, %v792
        %v987 = vpack.c.bf16 %v966, %v965
        %v988 = vpack.c.bf16 %v860, %v858
        %v989 = vpack.c.bf16 %v967, %v966
        %v990 = vpack.c.bf16 %v975, %v974
        %v991 = vpack.c.bf16 %v798, %v796
        %v992 = vpack.c.bf16 %v968, %v967
        %v993 = vpack.c.bf16 %v864, %v862
        %v994 = vpack.c.bf16 %v969, %v968
        %v995 = vpack.c.bf16 %v977, %v976
        %v996 = vpack.c.bf16 %v802, %v800
        %v997 = vpack.c.bf16 %v978, %v969
        %v998 = vpack.c.bf16 %v959, %v866
        %v999 = vld [vmem:[%s3] sm:$0xf]
        %v1000 = vld [vmem:[%s3 + $0x4] sm:$0xf]
        %v1001 = vld [vmem:[%s3 + $0x8] sm:$0xf]
        %v1002 = vld [vmem:[%s3 + $0xc] sm:$0xf]
        %v1003 = vld [vmem:[%s3 + $0x10] sm:$0xf]
        %v1004 = vld [vmem:[%s3 + $0x14] sm:$0xf]
        %v1005 = vld [vmem:[%s3 + $0x18] sm:$0xf]
        %v1006 = vld [vmem:[%s3 + $0x1c] sm:$0xf]
        %v1007 = vld [vmem:[%s3 + $0x20] sm:$0xf]
        %v1008 = vld [vmem:[%s3 + $0x24] sm:$0xf]
        %v1009 = vld [vmem:[%s3 + $0x28] sm:$0xf]
        %v1010 = vld [vmem:[%s3 + $0x2c] sm:$0xf]
        %v1011 = vld [vmem:[%s3 + $0x30] sm:$0xf]
        %v1012 = vld [vmem:[%s3 + $0x34] sm:$0xf]
        %v1013 = vld [vmem:[%s3 + $0x38] sm:$0xf]
        %v1014 = vld [vmem:[%s3 + $0x3c] sm:$0xf]
        %v1015 = vld [vmem:[%s3 + $0x40] sm:$0xf]
        %v1016 = vld [vmem:[%s3 + $0x44] sm:$0xf]
        %v1017 = vld [vmem:[%s3 + $0x48] sm:$0xf]
        %v1018 = vld [vmem:[%s3 + $0x4c] sm:$0xf]
        %v1019 = vld [vmem:[%s3 + $0x50] sm:$0xf]
        %v1020 = vld [vmem:[%s3 + $0x54] sm:$0xf]
        %v1021 = vld [vmem:[%s3 + $0x58] sm:$0xf]
        %v1022 = vld [vmem:[%s3 + $0x5c] sm:$0xf]
        %v1023 = vld [vmem:[%s3 + $0x60] sm:$0xf]
        %v1024 = vld [vmem:[%s3 + $0x64] sm:$0xf]
        %v1025 = vld [vmem:[%s3 + $0x68] sm:$0xf]
        %v1026 = vld [vmem:[%s3 + $0x6c] sm:$0xf]
        %v1027 = vld [vmem:[%s3 + $0x70] sm:$0xf]
        %v1028 = vld [vmem:[%s3 + $0x74] sm:$0xf]
        %v1029 = vld [vmem:[%s3 + $0x78] sm:$0xf]
        %v1030 = vld [vmem:[%s3 + $0x7c] sm:$0xf]
        %v1031 = vld [vmem:[%s3 + $0x80] sm:$0xf]
        %v1032 = vld [vmem:[%s3 + $0x84] sm:$0xf]
        %v1033 = vld [vmem:[%s3 + $0x88] sm:$0xf]
        %v1034 = vld [vmem:[%s3 + $0x8c] sm:$0xf]
        %v1035 = vld [vmem:[%s3 + $0x90] sm:$0xf]
        %v1036 = vld [vmem:[%s3 + $0x94] sm:$0xf]
        %v1037 = vld [vmem:[%s3 + $0x98] sm:$0xf]
        %v1038 = vld [vmem:[%s3 + $0x9c] sm:$0xf]
        %v1039 = vld [vmem:[%s3 + $0xa0] sm:$0xf]
        %v1040 = vld [vmem:[%s3 + $0xa4] sm:$0xf]
        %v1041 = vld [vmem:[%s3 + $0xa8] sm:$0xf]
        %v1042 = vld [vmem:[%s3 + $0xac] sm:$0xf]
        %v1043 = vld [vmem:[%s3 + $0xb0] sm:$0xf]
        %v1044 = vld [vmem:[%s3 + $0xb4] sm:$0xf]
        %v1045 = vld [vmem:[%s3 + $0xb8] sm:$0xf]
        %v1046 = vld [vmem:[%s3 + $0xbc] sm:$0xf]
        %v1047 = vld [vmem:[%s3 + $0xc0] sm:$0xf]
        %v1048 = vld [vmem:[%s3 + $0xc4] sm:$0xf]
        %v1049 = vld [vmem:[%s3 + $0xc8] sm:$0xf]
        %v1050 = vld [vmem:[%s3 + $0xcc] sm:$0xf]
        %v1051 = vld [vmem:[%s3 + $0xd0] sm:$0xf]
        %v1052 = vld [vmem:[%s3 + $0xd4] sm:$0xf]
        %v1053 = vld [vmem:[%s3 + $0xd8] sm:$0xf]
        %v1054 = vld [vmem:[%s3 + $0xdc] sm:$0xf]
        %v1055 = vld [vmem:[%s3 + $0xe0] sm:$0xf]
        %v1056 = vld [vmem:[%s3 + $0xe4] sm:$0xf]
        %v1057 = vld [vmem:[%s3 + $0xe8] sm:$0xf]
        %v1058 = vld [vmem:[%s3 + $0xec] sm:$0xf]
        %v1059 = vld [vmem:[%s3 + $0xf0] sm:$0xf]
        %v1060 = vld [vmem:[%s3 + $0xf4] sm:$0xf]
        %v1061 = vld [vmem:[%s3 + $0xf8] sm:$0xf]
        %v1062 = vld [vmem:[%s3 + $0xfc] sm:$0xf]
        %v1063 = vld [vmem:[%s3 + $0x100] sm:$0xf]
        %v1064 = vld [vmem:[%s3 + $0x104] sm:$0xf]
        %v1065 = vld [vmem:[%s3 + $0x108] sm:$0xf]
        %v1066 = vld [vmem:[%s3 + $0x10c] sm:$0xf]
        %v1067 = vld [vmem:[%s3 + $0x110] sm:$0xf]
        %v1068 = vld [vmem:[%s3 + $0x114] sm:$0xf]
        %v1069 = vld [vmem:[%s3 + $0x118] sm:$0xf]
        %v1070 = vld [vmem:[%s3 + $0x11c] sm:$0xf]
        %v1071 = vld [vmem:[%s6] sm:$0x1]
        %v1073 = vlaneseq
        %v1074 = vshrl.u32 %v1073, 7
        %v1075 = vsub.s32 0, %v1074
        %v1076 = vrot.slane %v1071, %v1075
        %v1150 = vunpack.c.l.b16 %v999
        %v1151 = vunpack.c.l.b16 %v1000
        %v1152 = vunpack.c.l.b16 %v1001
        %v1153 = vunpack.c.l.b16 %v1002
        %v1154 = vunpack.c.l.b16 %v1003
        %v1155 = vunpack.c.l.b16 %v1004
        %v1156 = vunpack.c.l.b16 %v1005
        %v1157 = vunpack.c.l.b16 %v1006
        %v1158 = vunpack.c.l.b16 %v1007
        %v1159 = vunpack.c.l.b16 %v1008
        %v1160 = vunpack.c.l.b16 %v1009
        %v1161 = vunpack.c.l.b16 %v1010
        %v1162 = vunpack.c.l.b16 %v1011
        %v1163 = vunpack.c.l.b16 %v1012
        %v1164 = vunpack.c.l.b16 %v1013
        %v1165 = vunpack.c.l.b16 %v1014
        %v1166 = vunpack.c.l.b16 %v1015
        %v1167 = vunpack.c.l.b16 %v1016
        %v1168 = vunpack.c.l.b16 %v1017
        %v1169 = vunpack.c.l.b16 %v1018
        %v1170 = vunpack.c.l.b16 %v1019
        %v1171 = vunpack.c.l.b16 %v1020
        %v1172 = vunpack.c.l.b16 %v1021
        %v1173 = vunpack.c.l.b16 %v1022
        %v1174 = vunpack.c.l.b16 %v1023
        %v1175 = vunpack.c.l.b16 %v1024
        %v1176 = vunpack.c.l.b16 %v1025
        %v1177 = vunpack.c.l.b16 %v1026
        %v1178 = vunpack.c.l.b16 %v1027
        %v1179 = vunpack.c.l.b16 %v1028
        %v1180 = vunpack.c.l.b16 %v1029
        %v1181 = vunpack.c.l.b16 %v1030
        %v1182 = vunpack.c.l.b16 %v1031
        %v1183 = vunpack.c.l.b16 %v1032
        %v1184 = vunpack.c.l.b16 %v1033
        %v1185 = vunpack.c.l.b16 %v1034
        %v1186 = vunpack.c.l.b16 %v1035
        %v1187 = vunpack.c.l.b16 %v1036
        %v1188 = vunpack.c.l.b16 %v1037
        %v1189 = vunpack.c.l.b16 %v1038
        %v1190 = vunpack.c.l.b16 %v1039
        %v1191 = vunpack.c.l.b16 %v1040
        %v1192 = vunpack.c.l.b16 %v1041
        %v1193 = vunpack.c.l.b16 %v1042
        %v1194 = vunpack.c.l.b16 %v1043
        %v1195 = vunpack.c.l.b16 %v1044
        %v1196 = vunpack.c.l.b16 %v1045
        %v1197 = vunpack.c.l.b16 %v1046
        %v1198 = vunpack.c.l.b16 %v1047
        %v1199 = vunpack.c.l.b16 %v1048
        %v1200 = vunpack.c.l.b16 %v1049
        %v1201 = vunpack.c.l.b16 %v1050
        %v1202 = vunpack.c.l.b16 %v1051
        %v1203 = vunpack.c.l.b16 %v1052
        %v1204 = vunpack.c.l.b16 %v1053
        %v1205 = vunpack.c.l.b16 %v1054
        %v1206 = vunpack.c.l.b16 %v1055
        %v1207 = vunpack.c.l.b16 %v1056
        %v1208 = vunpack.c.l.b16 %v1057
        %v1209 = vunpack.c.l.b16 %v1058
        %v1210 = vunpack.c.l.b16 %v1059
        %v1211 = vunpack.c.l.b16 %v1060
        %v1212 = vunpack.c.l.b16 %v1061
        %v1213 = vunpack.c.l.b16 %v1062
        %v1214 = vunpack.c.l.b16 %v1063
        %v1215 = vunpack.c.l.b16 %v1064
        %v1216 = vunpack.c.l.b16 %v1065
        %v1217 = vunpack.c.l.b16 %v1066
        %v1218 = vunpack.c.l.b16 %v1067
        %v1219 = vunpack.c.l.b16 %v1068
        %v1220 = vunpack.c.l.b16 %v1069
        %v1221 = vunpack.c.l.b16 %v1070
        %v1222 = vpack.c.b16 %v1151, %v1150
        %v1223 = vpack.c.b16 %v1153, %v1152
        %v1224 = vpack.c.b16 %v1155, %v1154
        %v1225 = vpack.c.b16 %v1157, %v1156
        %v1226 = vpack.c.b16 %v1159, %v1158
        %v1227 = vpack.c.b16 %v1161, %v1160
        %v1228 = vpack.c.b16 %v1163, %v1162
        %v1229 = vpack.c.b16 %v1165, %v1164
        %v1230 = vpack.c.b16 %v1167, %v1166
        %v1231 = vpack.c.b16 %v1169, %v1168
        %v1232 = vpack.c.b16 %v1171, %v1170
        %v1233 = vpack.c.b16 %v1173, %v1172
        %v1234 = vpack.c.b16 %v1175, %v1174
        %v1235 = vpack.c.b16 %v1177, %v1176
        %v1236 = vpack.c.b16 %v1179, %v1178
        %v1237 = vpack.c.b16 %v1181, %v1180
        %v1238 = vpack.c.b16 %v1183, %v1182
        %v1239 = vpack.c.b16 %v1185, %v1184
        %v1240 = vpack.c.b16 %v1187, %v1186
        %v1241 = vpack.c.b16 %v1189, %v1188
        %v1242 = vpack.c.b16 %v1191, %v1190
        %v1243 = vpack.c.b16 %v1193, %v1192
        %v1244 = vpack.c.b16 %v1195, %v1194
        %v1245 = vpack.c.b16 %v1197, %v1196
        %v1246 = vpack.c.b16 %v1199, %v1198
        %v1247 = vpack.c.b16 %v1201, %v1200
        %v1248 = vpack.c.b16 %v1203, %v1202
        %v1249 = vpack.c.b16 %v1205, %v1204
        %v1250 = vpack.c.b16 %v1207, %v1206
        %v1251 = vpack.c.b16 %v1209, %v1208
        %v1252 = vpack.c.b16 %v1211, %v1210
        %v1253 = vpack.c.b16 %v1213, %v1212
        %v1254 = vpack.c.b16 %v1215, %v1214
        %v1255 = vpack.c.b16 %v1217, %v1216
        %v1256 = vpack.c.b16 %v1219, %v1218
        %v1257 = vpack.c.b16 %v1221, %v1220
        %v1295 = vsel %vm961, %v983, 0
        %v1298 = vsel %vm961, %v988, 0
        %v1301 = vsel %vm961, %v993, 0
        %v1304 = vsel %vm961, %v998, 0
        %1306 = vmatprep.subr.bf16.mxu0 0
        %1307 = vmatpush1.bf16.msra.mxu0 %v1222
        %1308 = vmatprep.subr.bf16.mxu0 0
        %1309 = vmatpush1.bf16.msra.mxu0 %v1223
        %1310 = vmatprep.subr.bf16.mxu0 0
        %1311 = vmatpush1.bf16.msra.mxu0 %v1224
        %1312 = vmatprep.subr.bf16.mxu0 0
        %1313 = vmatpush1.bf16.msra.mxu0 %v1225
        %1314 = vmatprep.subr.bf16.mxu0 0
        %1315 = vmatpush1.bf16.msra.mxu0 %v1226
        %1316 = vmatprep.subr.bf16.mxu0 0
        %1317 = vmatpush1.bf16.msra.mxu0 %v1227
        %1318 = vmatprep.subr.bf16.mxu0 0
        %1319 = vmatpush1.bf16.msra.mxu0 %v1228
        %1320 = vmatprep.subr.bf16.mxu0 0
        %1321 = vmatpush1.bf16.msra.mxu0 %v1229
        %1322 = vmatprep.subr.bf16.mxu0 0
        %1323 = vmatpush1.bf16.msra.mxu0 %v1230
        %1324 = vmatprep.subr.bf16.mxu0 0
        %1325 = vmatpush1.bf16.msra.mxu0 %v1231
        %1326 = vmatprep.subr.bf16.mxu0 0
        %1327 = vmatpush1.bf16.msra.mxu0 %v1232
        %1328 = vmatprep.subr.bf16.mxu0 0
        %1329 = vmatpush1.bf16.msra.mxu0 %v1233
        %1330 = vmatprep.subr.bf16.mxu0 0
        %1331 = vmatpush1.bf16.msra.mxu0 %v1234
        %1332 = vmatprep.subr.bf16.mxu0 0
        %1333 = vmatpush1.bf16.msra.mxu0 %v1235
        %1334 = vmatprep.subr.bf16.mxu0 0
        %1335 = vmatpush1.bf16.msra.mxu0 %v1236
        %1336 = vmatprep.subr.bf16.mxu0 0
        %1337 = vmatpush1.bf16.msra.mxu0 %v1237
        %1338 = vmatprep.mubr.bf16.mxu0 %v980
        %1339 = vmatmul.mubr.bf16.gmra.mrb[0].mxu0 %v979
        %v1340 = vpop.f32.mrb[0].mxu0
        %v1341 = vadd.f32 %v1076, %v1340
        %v1342 = vpop.f32.mrb[0].mxu0
        %v1343 = vpop.f32.mrb[0].mxu0
        %v1344 = vadd.f32 %v1076, %v1343
        %v1345 = vpop.f32.mrb[0].mxu0
        %1346 = vmatprep.mubr.bf16.mxu0 %v985
        %1347 = vmatmul.mubr.bf16.gmra.mrb[0].mxu0 %v984
        %v1348 = vpop.f32.mrb[0].mxu0
        %v1349 = vadd.f32 %v1076, %v1348
        %v1350 = vpop.f32.mrb[0].mxu0
        %v1351 = vpop.f32.mrb[0].mxu0
        %v1352 = vadd.f32 %v1076, %v1351
        %v1353 = vpop.f32.mrb[0].mxu0
        %1354 = vmatprep.mubr.bf16.mxu0 %v990
        %1355 = vmatmul.mubr.bf16.gmra.mrb[0].mxu0 %v989
        %v1356 = vpop.f32.mrb[0].mxu0
        %v1357 = vadd.f32 %v1076, %v1356
        %v1358 = vpop.f32.mrb[0].mxu0
        %v1359 = vpop.f32.mrb[0].mxu0
        %v1360 = vadd.f32 %v1076, %v1359
        %v1361 = vpop.f32.mrb[0].mxu0
        %1362 = vmatprep.mubr.bf16.mxu0 %v995
        %1363 = vmatmul.mubr.bf16.gmra.mrb[0].mxu0 %v994
        %v1364 = vpop.f32.mrb[0].mxu0
        %v1365 = vadd.f32 %v1076, %v1364
        %v1366 = vpop.f32.mrb[0].mxu0
        %v1367 = vpop.f32.mrb[0].mxu0
        %v1368 = vadd.f32 %v1076, %v1367
        %v1369 = vpop.f32.mrb[0].mxu0
        %1370 = vdwg.mxu0
        %1371 = vmatprep.subr.bf16.mxu0 0
        %1372 = vmatpush1.bf16.msra.mxu0 %v1238
        %1373 = vmatprep.subr.bf16.mxu0 0
        %1374 = vmatpush1.bf16.msra.mxu0 %v1239
        %1375 = vmatprep.subr.bf16.mxu0 0
        %1376 = vmatpush1.bf16.msra.mxu0 %v1240
        %1377 = vmatprep.subr.bf16.mxu0 0
        %1378 = vmatpush1.bf16.msra.mxu0 %v1241
        %1379 = vmatprep.subr.bf16.mxu0 0
        %1380 = vmatpush1.bf16.msra.mxu0 %v1242
        %1381 = vmatprep.subr.bf16.mxu0 0
        %1382 = vmatpush1.bf16.msra.mxu0 %v1243
        %1383 = vmatprep.subr.bf16.mxu0 0
        %1384 = vmatpush1.bf16.msra.mxu0 %v1244
        %1385 = vmatprep.subr.bf16.mxu0 0
        %1386 = vmatpush1.bf16.msra.mxu0 %v1245
        %1387 = vmatprep.subr.bf16.mxu0 0
        %1388 = vmatpush1.bf16.msra.mxu0 %v1246
        %1389 = vmatprep.subr.bf16.mxu0 0
        %1390 = vmatpush1.bf16.msra.mxu0 %v1247
        %1391 = vmatprep.subr.bf16.mxu0 0
        %1392 = vmatpush1.bf16.msra.mxu0 %v1248
        %1393 = vmatprep.subr.bf16.mxu0 0
        %1394 = vmatpush1.bf16.msra.mxu0 %v1249
        %1395 = vmatprep.subr.bf16.mxu0 0
        %1396 = vmatpush1.bf16.msra.mxu0 %v1250
        %1397 = vmatprep.subr.bf16.mxu0 0
        %1398 = vmatpush1.bf16.msra.mxu0 %v1251
        %1399 = vmatprep.subr.bf16.mxu0 0
        %1400 = vmatpush1.bf16.msra.mxu0 %v1252
        %1401 = vmatprep.subr.bf16.mxu0 0
        %1402 = vmatpush1.bf16.msra.mxu0 %v1253
        %1403 = vmatprep.mubr.bf16.mxu0 %v982
        %1404 = vmatmul.mubr.bf16.gmra.mrb[0].mxu0 %v981
        %v1405 = vpop.f32.mrb[0].mxu0
        %v1406 = vadd.f32 %v1341, %v1405
        %v1407 = vpop.f32.mrb[0].mxu0
        %v1408 = vpop.f32.mrb[0].mxu0
        %v1409 = vadd.f32 %v1344, %v1408
        %v1410 = vpop.f32.mrb[0].mxu0
        %1411 = vmatprep.mubr.bf16.mxu0 %v987
        %1412 = vmatmul.mubr.bf16.gmra.mrb[0].mxu0 %v986
        %v1413 = vpop.f32.mrb[0].mxu0
        %v1414 = vadd.f32 %v1349, %v1413
        %v1415 = vpop.f32.mrb[0].mxu0
        %v1416 = vpop.f32.mrb[0].mxu0
        %v1417 = vadd.f32 %v1352, %v1416
        %v1418 = vpop.f32.mrb[0].mxu0
        %1419 = vmatprep.mubr.bf16.mxu0 %v992
        %1420 = vmatmul.mubr.bf16.gmra.mrb[0].mxu0 %v991
        %v1421 = vpop.f32.mrb[0].mxu0
        %v1422 = vadd.f32 %v1357, %v1421
        %v1423 = vpop.f32.mrb[0].mxu0
        %v1424 = vpop.f32.mrb[0].mxu0
        %v1425 = vadd.f32 %v1360, %v1424
        %v1426 = vpop.f32.mrb[0].mxu0
        %1427 = vmatprep.mubr.bf16.mxu0 %v997
        %1428 = vmatmul.mubr.bf16.gmra.mrb[0].mxu0 %v996
        %v1429 = vpop.f32.mrb[0].mxu0
        %v1430 = vadd.f32 %v1365, %v1429
        %v1431 = vpop.f32.mrb[0].mxu0
        %v1432 = vpop.f32.mrb[0].mxu0
        %v1433 = vadd.f32 %v1368, %v1432
        %v1434 = vpop.f32.mrb[0].mxu0
        %1435 = vdwg.mxu0
        %1436 = vmatprep.subr.bf16.mxu0 0
        %1437 = vmatpush1.bf16.msra.mxu0 %v1254
        %1438 = vmatprep.subr.bf16.mxu0 0
        %1439 = vmatpush1.bf16.msra.mxu0 %v1255
        %1440 = vmatprep.subr.bf16.mxu0 0
        %1441 = vmatpush1.bf16.msra.mxu0 %v1256
        %1442 = vmatprep.subr.bf16.mxu0 0
        %1443 = vmatpush1.bf16.msra.mxu0 %v1257
        %1444 = vmatprep.subr.bf16.mxu0 0
        %1445 = vmatpush1.bf16.msra.mxu0 0
        %1446 = vmatprep.subr.bf16.mxu0 0
        %1447 = vmatpush1.bf16.msra.mxu0 0
        %1448 = vmatprep.subr.bf16.mxu0 0
        %1449 = vmatpush1.bf16.msra.mxu0 0
        %1450 = vmatprep.subr.bf16.mxu0 0
        %1451 = vmatpush1.bf16.msra.mxu0 0
        %1452 = vmatprep.subr.bf16.mxu0 0
        %1453 = vmatpush1.bf16.msra.mxu0 0
        %1454 = vmatprep.subr.bf16.mxu0 0
        %1455 = vmatpush1.bf16.msra.mxu0 0
        %1456 = vmatprep.subr.bf16.mxu0 0
        %1457 = vmatpush1.bf16.msra.mxu0 0
        %1458 = vmatprep.subr.bf16.mxu0 0
        %1459 = vmatpush1.bf16.msra.mxu0 0
        %1460 = vmatprep.subr.bf16.mxu0 0
        %1461 = vmatpush1.bf16.msra.mxu0 0
        %1462 = vmatprep.subr.bf16.mxu0 0
        %1463 = vmatpush1.bf16.msra.mxu0 0
        %1464 = vmatprep.subr.bf16.mxu0 0
        %1465 = vmatpush1.bf16.msra.mxu0 0
        %1466 = vmatprep.subr.bf16.mxu0 0
        %1467 = vmatpush1.bf16.msra.mxu0 0
        %1468 = vmatprep.mubr.bf16.mxu0 0
        %1469 = vmatmul.mubr.bf16.gmra.mrb[0].mxu0 %v1295
        %v1470 = vpop.f32.mrb[0].mxu0
        %v1471 = vadd.f32 %v1406, %v1470
        %v1472 = vpop.f32.mrb[0].mxu0
        %v1473 = vpop.f32.mrb[0].mxu0
        %v1474 = vadd.f32 %v1409, %v1473
        %v1475 = vpop.f32.mrb[0].mxu0
        %1476 = vmatprep.mubr.bf16.mxu0 0
        %1477 = vmatmul.mubr.bf16.gmra.mrb[0].mxu0 %v1298
        %v1478 = vpop.f32.mrb[0].mxu0
        %v1479 = vadd.f32 %v1414, %v1478
        %v1480 = vpop.f32.mrb[0].mxu0
        %v1481 = vpop.f32.mrb[0].mxu0
        %v1482 = vadd.f32 %v1417, %v1481
        %v1483 = vpop.f32.mrb[0].mxu0
        %1484 = vmatprep.mubr.bf16.mxu0 0
        %1485 = vmatmul.mubr.bf16.gmra.mrb[0].mxu0 %v1301
        %v1486 = vpop.f32.mrb[0].mxu0
        %v1487 = vadd.f32 %v1422, %v1486
        %v1488 = vpop.f32.mrb[0].mxu0
        %v1489 = vpop.f32.mrb[0].mxu0
        %v1490 = vadd.f32 %v1425, %v1489
        %v1491 = vpop.f32.mrb[0].mxu0
        %1492 = vmatprep.mubr.bf16.mxu0 0
        %1493 = vmatmul.mubr.bf16.gmra.mrb[0].mxu0 %v1304
        %v1494 = vpop.f32.mrb[0].mxu0
        %v1495 = vadd.f32 %v1430, %v1494
        %v1496 = vpop.f32.mrb[0].mxu0
        %v1497 = vpop.f32.mrb[0].mxu0
        %v1498 = vadd.f32 %v1433, %v1497
        %v1499 = vpop.f32.mrb[0].mxu0
        %1500 = vdwg.mxu0
        %v1501 = vadd.f32 %v1471, 3.0
        %v1502 = vadd.f32 %v1474, 3.0
        %v1503 = vadd.f32 %v1479, 3.0
        %v1504 = vadd.f32 %v1482, 3.0
        %v1505 = vadd.f32 %v1487, 3.0
        %v1506 = vadd.f32 %v1490, 3.0
        %v1507 = vadd.f32 %v1495, 3.0
        %v1508 = vadd.f32 %v1498, 3.0
        %v1509 = vmax.f32 %v1501, 0.0
        %v1510 = vmax.f32 %v1502, 0.0
        %v1511 = vmax.f32 %v1503, 0.0
        %v1512 = vmax.f32 %v1504, 0.0
        %v1513 = vmax.f32 %v1505, 0.0
        %v1514 = vmax.f32 %v1506, 0.0
        %v1515 = vmax.f32 %v1507, 0.0
        %v1516 = vmax.f32 %v1508, 0.0
        %v1517 = vmin.f32 %v1509, 6.0
        %v1518 = vmin.f32 %v1510, 6.0
        %v1519 = vmin.f32 %v1511, 6.0
        %v1520 = vmin.f32 %v1512, 6.0
        %v1521 = vmin.f32 %v1513, 6.0
        %v1522 = vmin.f32 %v1514, 6.0
        %v1523 = vmin.f32 %v1515, 6.0
        %v1524 = vmin.f32 %v1516, 6.0
        %v1525 = vmul.f32 %v1471, %v1517
        %v1526 = vmul.f32 %v1474, %v1518
        %v1527 = vmul.f32 %v1479, %v1519
        %v1528 = vmul.f32 %v1482, %v1520
        %v1529 = vmul.f32 %v1487, %v1521
        %v1530 = vmul.f32 %v1490, %v1522
        %v1531 = vmul.f32 %v1495, %v1523
        %v1532 = vmul.f32 %v1498, %v1524
        %v1533 = vmul.f32 %v1525, 0.16666667
        %v1534 = vmul.f32 %v1526, 0.16666667
        %v1535 = vmul.f32 %v1527, 0.16666667
        %v1536 = vmul.f32 %v1528, 0.16666667
        %v1537 = vmul.f32 %v1529, 0.16666667
        %v1538 = vmul.f32 %v1530, 0.16666667
        %v1539 = vmul.f32 %v1531, 0.16666667
        %v1540 = vmul.f32 %v1532, 0.16666667
        %1549 = vrot.lane.b32.xlu0 %v519, 64
        %v1550 = vpop.permute.xlu0 %1549
        %1551 = vrot.lane.b32.xlu0 %v520, 64
        %v1552 = vpop.permute.xlu0 %1551
        %1553 = vrot.lane.b32.xlu0 %v521, 64
        %v1554 = vpop.permute.xlu0 %1553
        %1555 = vrot.lane.b32.xlu0 %v522, 64
        %v1556 = vpop.permute.xlu0 %1555
        %1557 = vrot.lane.b32.xlu0 %v523, 64
        %v1558 = vpop.permute.xlu0 %1557
        %1559 = vrot.lane.b32.xlu0 %v524, 64
        %v1560 = vpop.permute.xlu0 %1559
        %1561 = vrot.lane.b32.xlu0 %v525, 64
        %v1562 = vpop.permute.xlu0 %1561
        %1563 = vrot.lane.b32.xlu0 %v526, 64
        %v1564 = vpop.permute.xlu0 %1563
        %v1573 = vsel %vm961, %v1533, %v1550
        %v1574 = vsel %vm961, %v1534, %v1552
        %v1575 = vsel %vm961, %v1535, %v1554
        %v1576 = vsel %vm961, %v1536, %v1556
        %v1577 = vsel %vm961, %v1537, %v1558
        %v1578 = vsel %vm961, %v1538, %v1560
        %v1579 = vsel %vm961, %v1539, %v1562
        %v1580 = vsel %vm961, %v1540, %v1564
        %1581 = vst [vmem:[%s271] sm:$0xff] %v1573
        %1582 = vst [vmem:[%s271 + $0x8] sm:$0xff] %v1574
        %1583 = vst [vmem:[%s271 + $0x10] sm:$0xff] %v1575
        %1584 = vst [vmem:[%s271 + $0x18] sm:$0xff] %v1576
        %1585 = vst [vmem:[%s271 + $0x20] sm:$0xff] %v1577
        %1586 = vst [vmem:[%s271 + $0x28] sm:$0xff] %v1578
        %1587 = vst [vmem:[%s271 + $0x30] sm:$0xff] %v1579
        %1588 = vst [vmem:[%s271 + $0x38] sm:$0xff] %v1580
        %s1589 = sand.u32 %s181, 1
        %s1590 = scalar_lea.sflag [#allocation3], %s1589
        %s1591 = sand.u32 %s181, 1
        %s1592 = smul.addr %s1591, 64
        %s1593 = scalar_lea.vmem [#allocation2], %s1592
        // Predicated region
        $region49: #{tb_forward.1} parent=47 // pred_check
          %p1594 = pneg %p191
        $region50: #{tb_forward.1} parent=47 // pred_check_branch
          %1596 = sbr.rel (%p1594) target = $region52
        $region51: #{tb_forward.1} parent=47 // pred_region
          %s1598 = ssub.s32 1024, 1024
          %1599 = vsyncadd %s1590, %s1598
          %s1600 = smul.addr %s21, 8
          %s1601 = smul.addr %s1600, 128
          %s1602 = scalar_lea.hbm %s7, %s1601
          %s1603 = sshll.u32 %s1593, 4
          %s1604 = int_to_ptr.vmem [resolvable:$true] %s1603
          %1609 = dma.vmem_to_hbm [thread:$0]  %s1604, 1024, %s1602, %s1590, 128, 128, 8
        $region52: #{tb_forward.1} parent=47 // pred_fallthru
          _
      $region48: #{tb_forward.1} parent=5 // pred_fallthru
        _
      %p1610 = scmp.le.s32.totalorder 2, %s16
      // Predicated region
      $region53: #{tb_forward.1} parent=5 // pred_check
        %p1611 = pneg %p1610
      $region54: #{tb_forward.1} parent=5 // pred_check_branch
        %1613 = sbr.rel (%p1611) target = $region56
      $region55: #{tb_forward.1} parent=5 // pred_region
        %s1614 = ssub.s32 %s16, 2
        // Predicated region
        $region57: #{tb_forward.1} parent=55 // pred_check
          %p1615 = pneg %p197
        $region58: #{tb_forward.1} parent=55 // pred_check_branch
          %1617 = sbr.rel (%p1615) target = $region60
        $region59: #{tb_forward.1} parent=55 // pred_region
          %s1618 = sand.u32 %s182, 1
          %s1619 = scalar_lea.sflag [#allocation3], %s1618
          %s1620 = sand.u32 %s182, 1
          %s1621 = smul.addr %s1620, 64
          %s1622 = scalar_lea.vmem [#allocation2], %s1621
          %1623 = dma.done %s1619, 1024
        $region60: #{tb_forward.1} parent=55 // pred_fallthru
          _
      $region56: #{tb_forward.1} parent=5 // pred_fallthru
        _
    $region6: #{tb_forward.1} parent=1 // loop_footer
      %s20 = sadd.s32 1, %s16
    $region7: #{tb_forward.1} parent=1 // loop_footer_branch
      %15 = sbr.rel target = $region3
    $region8: #{tb_forward.1} parent=1 // loop_exit
      _
    %1624 = vsyncpa [#allocation3], 1
    %s1625 = scalar_lea.sflag [#allocation3], 1
    %1626 = vsyncpa %s1625, 1

</llo_original>
